<compile_context>
chip_gen: v6e
topology: v6e:2x2x1
jax: 0.10.0
libtpu: 0.0.40
codegen_flags: <defaults>
</compile_context>

<pallas_src>
import jax
import jax.numpy as jnp
from jax import lax
from jax.experimental import pallas as pl
from jax.experimental.pallas import tpu as pltpu

HIDDEN_DIM = 128
EMB_DIM = 128
N_IMAGE_DESCRIPTOR = 49
N_VOCAB = 1024
INPUT_DIM = HIDDEN_DIM + EMB_DIM        # LSTM / sentinel input size

K_PAD = 64                              # descriptor/projection axis padded (power of 2)
_K_SHIFT = K_PAD.bit_length() - 1
assert K_PAD & (K_PAD - 1) == 0

# At full scale (H=512, N_VOCAB=40000) use VOCAB_TILE=2048 so two bf16 weight
# buffers (512*2048*2B = 2 MB each) fit comfortably in v7x's smaller VMEM.
VOCAB_TILE = 512


def _fused_step_kernel(xh_ref, cprev_ref, vflat_ref,
                       w_comb_ref, bias_ref,
                       w_v_ref, w_g_ref, w_s_ref, w_h_ref,
                       feat_ref, hout_ref, cout_ref):
    """LSTMCell + visual sentinel + adaptive attention, fully batched."""
    f32 = jnp.float32
    B = xh_ref.shape[0]
    H = cprev_ref.shape[1]
    BKD = vflat_ref.shape[0]            # B * K_PAD  (rows = b*K_PAD + k)

    # ---- fused gate + sentinel projection: one MXU pass over [x_t || h_prev]
    proj = jnp.dot(xh_ref[...], w_comb_ref[...],
                   preferred_element_type=f32) + bias_ref[...]       # (B, 5H)
    i_g = jax.nn.sigmoid(proj[:, 0:H])
    f_g = jax.nn.sigmoid(proj[:, H:2 * H])
    g_g = jnp.tanh(proj[:, 2 * H:3 * H])
    o_g = jax.nn.sigmoid(proj[:, 3 * H:4 * H])
    sent_g = jax.nn.sigmoid(proj[:, 4 * H:5 * H])

    c_new = f_g * cprev_ref[...] + i_g * g_g
    tanh_c = jnp.tanh(c_new)
    h_new = o_g * tanh_c
    s_t = sent_g * tanh_c                                            # visual sentinel

    # ---- sentinel attention score (padded columns of W_g/W_s/w_h are zero)
    w_h_row = w_h_ref[...]                                           # (1, K_PAD)
    shp = jnp.dot(h_new, w_g_ref[...], preferred_element_type=f32)   # (B, K_PAD)
    svs = jnp.tanh(jnp.dot(s_t, w_s_ref[...], preferred_element_type=f32) + shp)
    a_vs = jnp.sum(svs * w_h_row, axis=-1, keepdims=True)            # (B, 1)

    # ---- spatial scores: batch folded into sublanes, descriptors padded to K_PAD
    v_flat = vflat_ref[...]                                          # (B*K_PAD, H)
    img = jnp.dot(v_flat, w_v_ref[...], preferred_element_type=f32)  # (B*K_PAD, K_PAD)

    # selector matrices from iota (batch-generic, no relayouts / reshapes)
    selT = (jnp.right_shift(lax.broadcasted_iota(jnp.int32, (BKD, B), 0), _K_SHIFT)
            == lax.broadcasted_iota(jnp.int32, (BKD, B), 1)).astype(f32)   # (B*K_PAD, B)
    sel = (lax.broadcasted_iota(jnp.int32, (B, BKD), 0)
           == jnp.right_shift(lax.broadcasted_iota(jnp.int32, (B, BKD), 1),
                              _K_SHIFT)).astype(f32)                       # (B, B*K_PAD)

    # shp[b, k] as a (B*K_PAD, 1) column: replicate per-batch rows, take block diagonal
    shp_rep = jnp.dot(selT, shp, preferred_element_type=f32)         # (B*K_PAD, K_PAD)
    diag = (jnp.bitwise_and(lax.broadcasted_iota(jnp.int32, (BKD, K_PAD), 0), K_PAD - 1)
            == lax.broadcasted_iota(jnp.int32, (BKD, K_PAD), 1)).astype(f32)
    shp_col = jnp.sum(shp_rep * diag, axis=-1, keepdims=True)        # (B*K_PAD, 1)

    tn = jnp.tanh(img + shp_col)
    z_col = jnp.sum(tn * w_h_row, axis=-1, keepdims=True)            # (B*K_PAD, 1)

    # mask padded descriptors before the softmax
    kidx = jnp.bitwise_and(lax.broadcasted_iota(jnp.int32, (BKD, 1), 0), K_PAD - 1)
    valid = kidx < N_IMAGE_DESCRIPTOR
    z_col = jnp.where(valid, z_col, f32(-1e30))

    # single-exp softmax + beta with one shared stabilizer
    m_all = jnp.maximum(jnp.max(z_col, axis=0, keepdims=True),
                        jnp.max(a_vs, axis=0, keepdims=True))        # (1, 1)
    e_col = jnp.exp(z_col - m_all) * valid.astype(f32)               # (B*K_PAD, 1)
    e_avs = jnp.exp(a_vs - m_all)                                    # (B, 1)

    sum_e = jnp.dot(sel, e_col, preferred_element_type=f32)          # (B, 1)
    inv_sum = pl.reciprocal(sum_e, approx=True)
    beta = e_avs * pl.reciprocal(sum_e + e_avs, approx=True)         # (B, 1)

    c_t = jnp.dot(sel, e_col * v_flat,
                  preferred_element_type=f32) * inv_sum              # (B, H)
    c_hat = beta * s_t + (1.0 - beta) * c_t

    feat_ref[...] = c_hat + h_new
    hout_ref[...] = h_new
    cout_ref[...] = c_new


def _vocab_proj_kernel(feat_ref, w_ref, out_ref):
    """(B, H) @ (H, VOCAB_TILE) bias-free projection (bf16 in, f32 accumulate)."""
    out_ref[...] = jnp.dot(feat_ref[...], w_ref[...],
                           preferred_element_type=jnp.float32)


def prepare_params(p):
    """One-time weight packing / padding / casting (outside jit — not per step)."""
    H, D, K, KP = HIDDEN_DIM, INPUT_DIM, N_IMAGE_DESCRIPTOR, K_PAD
    # stacked projection: columns [0,4H) = LSTM gates (i,f,g,o), [4H,5H) = sentinel gate
    w_comb = jnp.concatenate([
        jnp.concatenate([p["W_ih"].T, p["W_x"]], axis=1),            # rows for x_t
        jnp.concatenate([p["W_hh"].T, p["W_h_sent"]], axis=1),       # rows for h_prev
    ], axis=0).astype(jnp.float32)                                   # (D+H, 5H)
    bias = jnp.concatenate([p["b_ih"] + p["b_hh"],
                            jnp.zeros((H,), jnp.float32)]).reshape(1, 5 * H)
    pad_k = ((0, 0), (0, KP - K))
    n_vpad = -(-N_VOCAB // VOCAB_TILE) * VOCAB_TILE                  # handles ragged vocab
    return {
        "W_comb": w_comb,
        "bias": bias,
        "W_v_pad": jnp.pad(p["W_v"], pad_k),
        "W_g_pad": jnp.pad(p["W_g"], pad_k),
        "W_s_pad": jnp.pad(p["W_s"], pad_k),
        "w_h_row": jnp.pad(p["w_h"], (0, KP - K)).reshape(1, KP),
        # pre-transposed, vocab-padded, bf16 (halves HBM traffic of the dominant matmul)
        "W_mlp_T": jnp.pad(p["W_mlp"].T,
                           ((0, 0), (0, n_vpad - N_VOCAB))).astype(jnp.bfloat16),
    }


@jax.jit
def adaptive_attention_lstm_forward(V, x_t, prev_h, prev_c, prep):
    B = V.shape[0]
    H = HIDDEN_DIM

    xh = jnp.concatenate([x_t, prev_h], axis=1)                      # (B, D+H)
    v_flat = jnp.pad(V, ((0, 0), (0, K_PAD - N_IMAGE_DESCRIPTOR), (0, 0))
                     ).reshape(B * K_PAD, H)                         # (B*K_PAD, H)

    vmem = pl.BlockSpec(memory_space=pltpu.MemorySpace.VMEM)
    feat, h_new, c_new = pl.pallas_call(
        _fused_step_kernel,
        out_shape=(jax.ShapeDtypeStruct((B, H), jnp.float32),
                   jax.ShapeDtypeStruct((B, H), jnp.float32),
                   jax.ShapeDtypeStruct((B, H), jnp.float32)),
        in_specs=[vmem] * 9,
        out_specs=(vmem, vmem, vmem),
        compiler_params=pltpu.CompilerParams(vmem_limit_bytes=64 * 1024 * 1024),
    )(xh, prev_c, v_flat,
      prep["W_comb"], prep["bias"],
      prep["W_v_pad"], prep["W_g_pad"], prep["W_s_pad"], prep["w_h_row"])

    # ---- vocab projection: stream pre-transposed bf16 weights, parallel grid ----
    w_mlp_t = prep["W_mlp_T"]
    n_vpad = w_mlp_t.shape[1]
    out_pad = pl.pallas_call(
        _vocab_proj_kernel,
        out_shape=jax.ShapeDtypeStruct((B, n_vpad), jnp.float32),
        grid=(n_vpad // VOCAB_TILE,),
        in_specs=[pl.BlockSpec((B, H), lambda j: (0, 0)),
                  pl.BlockSpec((H, VOCAB_TILE), lambda j: (0, j))],
        out_specs=pl.BlockSpec((B, VOCAB_TILE), lambda j: (0, j)),
        compiler_params=pltpu.CompilerParams(
            dimension_semantics=("parallel",),
            vmem_limit_bytes=64 * 1024 * 1024),
    )(feat.astype(jnp.bfloat16), w_mlp_t)

    return out_pad[:, :N_VOCAB], h_new, c_new


def reference_forward(V, x_t, prev_h, prev_c, p):
    """Pure-JAX mirror of the PyTorch forward pass (for verification)."""
    H, K = HIDDEN_DIM, N_IMAGE_DESCRIPTOR
    gates = (x_t @ p["W_ih"].T + p["b_ih"]
             + prev_h @ p["W_hh"].T + p["b_hh"])
    i = jax.nn.sigmoid(gates[:, :H])
    f = jax.nn.sigmoid(gates[:, H:2 * H])
    g = jnp.tanh(gates[:, 2 * H:3 * H])
    o = jax.nn.sigmoid(gates[:, 3 * H:])
    c_new = f * prev_c + i * g
    h_new = o * jnp.tanh(c_new)

    g_t = jax.nn.sigmoid(x_t @ p["W_x"] + prev_h @ p["W_h_sent"])
    s_t = g_t * jnp.tanh(c_new)

    image_part = jnp.einsum("bkh,hn->bkn", V, p["W_v"])
    shp = h_new @ p["W_g"]
    hidden_part = shp[:, :, None] * jnp.ones((1, 1, K), jnp.float32)
    z = jnp.einsum("bkn,n->bk", jnp.tanh(image_part + hidden_part), p["w_h"])
    alpha = jax.nn.softmax(z, axis=1)
    c_t = jnp.sum(V * alpha[:, :, None], axis=1)
    avs = jnp.einsum("bk,k->b", jnp.tanh(s_t @ p["W_s"] + shp), p["w_h"])
    concat = jnp.concatenate([z, avs[:, None]], axis=1)
    beta = jax.nn.softmax(concat, axis=1)[:, -1:]
    c_hat = beta * s_t + (1.0 - beta) * c_t
    out = (c_hat + h_new) @ p["W_mlp"].T
    return out, h_new, c_new


if __name__ == "__main__":
    B = 2
    key = jax.random.PRNGKey(0)
    ks = jax.random.split(key, 16)
    sc = jnp.float32(0.1)
    params = {
        "W_ih": jax.random.normal(ks[0], (4 * HIDDEN_DIM, INPUT_DIM), jnp.float32) * sc,
        "W_hh": jax.random.normal(ks[1], (4 * HIDDEN_DIM, HIDDEN_DIM), jnp.float32) * sc,
        "b_ih": jax.random.normal(ks[2], (4 * HIDDEN_DIM,), jnp.float32) * sc,
        "b_hh": jax.random.normal(ks[3], (4 * HIDDEN_DIM,), jnp.float32) * sc,
        "W_x": jax.random.normal(ks[4], (INPUT_DIM, HIDDEN_DIM), jnp.float32) * sc,
        "W_h_sent": jax.random.normal(ks[5], (HIDDEN_DIM, HIDDEN_DIM), jnp.float32) * sc,
        "w_h": jax.random.normal(ks[6], (N_IMAGE_DESCRIPTOR,), jnp.float32) * sc,
        "W_v": jax.random.normal(ks[7], (HIDDEN_DIM, N_IMAGE_DESCRIPTOR), jnp.float32) * sc,
        "W_g": jax.random.normal(ks[8], (HIDDEN_DIM, N_IMAGE_DESCRIPTOR), jnp.float32) * sc,
        "W_s": jax.random.normal(ks[9], (HIDDEN_DIM, N_IMAGE_DESCRIPTOR), jnp.float32) * sc,
        "W_mlp": jax.random.normal(ks[10], (N_VOCAB, HIDDEN_DIM), jnp.float32) * sc,
    }
    V = jax.random.normal(ks[11], (B, N_IMAGE_DESCRIPTOR, HIDDEN_DIM), jnp.float32)
    x_t = jax.random.normal(ks[12], (B, INPUT_DIM), jnp.float32)
    prev_h = jax.random.normal(ks[13], (B, HIDDEN_DIM), jnp.float32)
    prev_c = jax.random.normal(ks[14], (B, HIDDEN_DIM), jnp.float32)

    prep = prepare_params(params)   # one-time packing/padding/bf16 cast (outside jit)

    out, h_new, c_new = adaptive_attention_lstm_forward(V, x_t, prev_h, prev_c, prep)
    jax.block_until_ready((out, h_new, c_new))

    ref_out, ref_h, ref_c = reference_forward(V, x_t, prev_h, prev_c, params)
    assert jnp.allclose(h_new, ref_h, atol=1e-4, rtol=1e-4)
    assert jnp.allclose(c_new, ref_c, atol=1e-4, rtol=1e-4)
    # logits use bf16 vocab weights + approx reciprocals -> looser tolerance
    assert jnp.allclose(out, ref_out, atol=2e-2, rtol=2e-2)
    print("KERNEL_OK")
</pallas_src>

<mosaic_0001>
module attributes {stable_mosaic.version = 11 : i64} {
  func.func @_vocab_proj_kernel(%arg0: i32, %arg1: memref<2x128xbf16, #tpu.memory_space<vmem>>, %arg2: memref<128x512xbf16, #tpu.memory_space<vmem>>, %arg3: memref<2x512xf32, #tpu.memory_space<vmem>>) attributes {dimension_semantics = [#tpu.dimension_semantics<parallel>], iteration_bounds = array<i64: 2>, scalar_prefetch = 0 : i64, scratch_operands = 0 : i64, tpu.core_type = #tpu.core_type<tc>, window_params = [{pipeline_mode = #tpu.pipeline_mode<synchronous>, transform_indices = @transform_0, window_bounds = array<i64: 2, 128>}, {transform_indices = @transform_1, window_bounds = array<i64: 128, 512>}, {transform_indices = @transform_2, window_bounds = array<i64: 2, 512>}]} {
    %c0 = arith.constant 0 : index
    %c0_0 = arith.constant 0 : index
    %0 = vector.load %arg1[%c0, %c0_0] : memref<2x128xbf16, #tpu.memory_space<vmem>>, vector<2x128xbf16>
    %c0_1 = arith.constant 0 : index
    %c0_2 = arith.constant 0 : index
    %1 = vector.load %arg2[%c0_1, %c0_2] : memref<128x512xbf16, #tpu.memory_space<vmem>>, vector<128x512xbf16>
    %cst = arith.constant dense<0.000000e+00> : vector<2x512xf32>
    %2 = tpu.matmul %0, %1, %cst {dimension_numbers = #tpu.dot_dimension_numbers<[1], [0], [0], [1], [0, 0, 1, 1], [], []>} : vector<2x128xbf16>, vector<128x512xbf16>, vector<2x512xf32> -> vector<2x512xf32>
    %c0_3 = arith.constant 0 : index
    %c0_4 = arith.constant 0 : index
    %3 = vector.load %arg3[%c0_3, %c0_4] : memref<2x512xf32, #tpu.memory_space<vmem>>, vector<2x512xf32>
    tpu.vector_store %arg3[%c0_3, %c0_4], %2 {strides = array<i32>} : memref<2x512xf32, #tpu.memory_space<vmem>>, vector<2x512xf32>,
    return
  }
  func.func @transform_0(%arg0: i32) -> (i32, i32) {
    %c0_i32 = arith.constant 0 : i32
    %c0_i32_0 = arith.constant 0 : i32
    %c0_i32_1 = arith.constant 0 : i32
    return %c0_i32, %c0_i32_0 : i32, i32
  }
  func.func @transform_1(%arg0: i32) -> (i32, i32) {
    %c0_i32 = arith.constant 0 : i32
    %c0_i32_0 = arith.constant 0 : i32
    return %c0_i32, %arg0 : i32, i32
  }
  func.func @transform_2(%arg0: i32) -> (i32, i32) {
    %c0_i32 = arith.constant 0 : i32
    %c0_i32_0 = arith.constant 0 : i32
    return %c0_i32, %arg0 : i32, i32
  }
}

module attributes {stable_mosaic.version = 11 : i64} {
  func.func @_fused_step_kernel(%arg0: memref<2x384xf32, #tpu.memory_space<vmem>>, %arg1: memref<2x128xf32, #tpu.memory_space<vmem>>, %arg2: memref<128x128xf32, #tpu.memory_space<vmem>>, %arg3: memref<384x640xf32, #tpu.memory_space<vmem>>, %arg4: memref<1x640xf32, #tpu.memory_space<vmem>>, %arg5: memref<128x64xf32, #tpu.memory_space<vmem>>, %arg6: memref<128x64xf32, #tpu.memory_space<vmem>>, %arg7: memref<128x64xf32, #tpu.memory_space<vmem>>, %arg8: memref<1x64xf32, #tpu.memory_space<vmem>>, %arg9: memref<2x128xf32, #tpu.memory_space<vmem>>, %arg10: memref<2x128xf32, #tpu.memory_space<vmem>>, %arg11: memref<2x128xf32, #tpu.memory_space<vmem>>) attributes {dimension_semantics = [], scalar_prefetch = 0 : i64, scratch_operands = 0 : i64, tpu.core_type = #tpu.core_type<tc>} {
    %c0 = arith.constant 0 : index
    %c0_0 = arith.constant 0 : index
    %0 = vector.load %arg0[%c0, %c0_0] : memref<2x384xf32, #tpu.memory_space<vmem>>, vector<2x384xf32>
    %c0_1 = arith.constant 0 : index
    %c0_2 = arith.constant 0 : index
    %1 = vector.load %arg3[%c0_1, %c0_2] : memref<384x640xf32, #tpu.memory_space<vmem>>, vector<384x640xf32>
    %cst = arith.constant dense<0.000000e+00> : vector<2x640xf32>
    %2 = tpu.matmul %0, %1, %cst {dimension_numbers = #tpu.dot_dimension_numbers<[1], [0], [0], [1], [0, 0, 1, 1], [], []>} : vector<2x384xf32>, vector<384x640xf32>, vector<2x640xf32> -> vector<2x640xf32>
    %c0_3 = arith.constant 0 : index
    %c0_4 = arith.constant 0 : index
    %3 = vector.load %arg4[%c0_3, %c0_4] : memref<1x640xf32, #tpu.memory_space<vmem>>, vector<1x640xf32>
    %4 = vector.broadcast %3 : vector<1x640xf32> to vector<2x640xf32>
    %5 = arith.addf %2, %4 : vector<2x640xf32>
    %6 = vector.extract_strided_slice %5 {offsets = [0, 0], sizes = [2, 128], strides = [1, 1]} : vector<2x640xf32> to vector<2x128xf32>
    %7 = arith.negf %6 : vector<2x128xf32>
    %8 = math.exp %7 : vector<2x128xf32>
    %cst_5 = arith.constant 1.000000e+00 : f32
    %9 = vector.broadcast %cst_5 : f32 to vector<2x128xf32>
    %10 = arith.addf %9, %8 : vector<2x128xf32>
    %11 = arith.divf %9, %10 : vector<2x128xf32>
    %12 = vector.extract_strided_slice %5 {offsets = [0, 128], sizes = [2, 128], strides = [1, 1]} : vector<2x640xf32> to vector<2x128xf32>
    %13 = arith.negf %12 : vector<2x128xf32>
    %14 = math.exp %13 : vector<2x128xf32>
    %cst_6 = arith.constant 1.000000e+00 : f32
    %15 = vector.broadcast %cst_6 : f32 to vector<2x128xf32>
    %16 = arith.addf %15, %14 : vector<2x128xf32>
    %17 = arith.divf %15, %16 : vector<2x128xf32>
    %18 = vector.extract_strided_slice %5 {offsets = [0, 256], sizes = [2, 128], strides = [1, 1]} : vector<2x640xf32> to vector<2x128xf32>
    %19 = math.tanh %18 : vector<2x128xf32>
    %20 = vector.extract_strided_slice %5 {offsets = [0, 384], sizes = [2, 128], strides = [1, 1]} : vector<2x640xf32> to vector<2x128xf32>
    %21 = arith.negf %20 : vector<2x128xf32>
    %22 = math.exp %21 : vector<2x128xf32>
    %cst_7 = arith.constant 1.000000e+00 : f32
    %23 = vector.broadcast %cst_7 : f32 to vector<2x128xf32>
    %24 = arith.addf %23, %22 : vector<2x128xf32>
    %25 = arith.divf %23, %24 : vector<2x128xf32>
    %26 = vector.extract_strided_slice %5 {offsets = [0, 512], sizes = [2, 128], strides = [1, 1]} : vector<2x640xf32> to vector<2x128xf32>
    %27 = arith.negf %26 : vector<2x128xf32>
    %28 = math.exp %27 : vector<2x128xf32>
    %cst_8 = arith.constant 1.000000e+00 : f32
    %29 = vector.broadcast %cst_8 : f32 to vector<2x128xf32>
    %30 = arith.addf %29, %28 : vector<2x128xf32>
    %31 = arith.divf %29, %30 : vector<2x128xf32>
    %c0_9 = arith.constant 0 : index
    %c0_10 = arith.constant 0 : index
    %32 = vector.load %arg1[%c0_9, %c0_10] : memref<2x128xf32, #tpu.memory_space<vmem>>, vector<2x128xf32>
    %33 = arith.mulf %17, %32 : vector<2x128xf32>
    %34 = arith.mulf %11, %19 : vector<2x128xf32>
    %35 = arith.addf %33, %34 : vector<2x128xf32>
    %36 = math.tanh %35 : vector<2x128xf32>
    %37 = arith.mulf %25, %36 : vector<2x128xf32>
    %38 = arith.mulf %31, %36 : vector<2x128xf32>
    %c0_11 = arith.constant 0 : index
    %c0_12 = arith.constant 0 : index
    %39 = vector.load %arg8[%c0_11, %c0_12] : memref<1x64xf32, #tpu.memory_space<vmem>>, vector<1x64xf32>
    %c0_13 = arith.constant 0 : index
    %c0_14 = arith.constant 0 : index
    %40 = vector.load %arg6[%c0_13, %c0_14] : memref<128x64xf32, #tpu.memory_space<vmem>>, vector<128x64xf32>
    %cst_15 = arith.constant dense<0.000000e+00> : vector<2x64xf32>
    %41 = tpu.matmul %37, %40, %cst_15 {dimension_numbers = #tpu.dot_dimension_numbers<[1], [0], [0], [1], [0, 0, 1, 1], [], []>} : vector<2x128xf32>, vector<128x64xf32>, vector<2x64xf32> -> vector<2x64xf32>
    %c0_16 = arith.constant 0 : index
    %c0_17 = arith.constant 0 : index
    %42 = vector.load %arg7[%c0_16, %c0_17] : memref<128x64xf32, #tpu.memory_space<vmem>>, vector<128x64xf32>
    %cst_18 = arith.constant dense<0.000000e+00> : vector<2x64xf32>
    %43 = tpu.matmul %38, %42, %cst_18 {dimension_numbers = #tpu.dot_dimension_numbers<[1], [0], [0], [1], [0, 0, 1, 1], [], []>} : vector<2x128xf32>, vector<128x64xf32>, vector<2x64xf32> -> vector<2x64xf32>
    %44 = arith.addf %43, %41 : vector<2x64xf32>
    %45 = math.tanh %44 : vector<2x64xf32>
    %46 = vector.broadcast %39 : vector<1x64xf32> to vector<2x64xf32>
    %47 = arith.mulf %45, %46 : vector<2x64xf32>
    %cst_19 = arith.constant dense<0.000000e+00> : vector<2xf32>
    %48 = vector.multi_reduction <add>, %47, %cst_19 [1] : vector<2x64xf32> to vector<2xf32>
    %49 = vector.shape_cast %48 : vector<2xf32> to vector<2x1xf32>
    %c0_20 = arith.constant 0 : index
    %c0_21 = arith.constant 0 : index
    %50 = vector.load %arg2[%c0_20, %c0_21] : memref<128x128xf32, #tpu.memory_space<vmem>>, vector<128x128xf32>
    %c0_22 = arith.constant 0 : index
    %c0_23 = arith.constant 0 : index
    %51 = vector.load %arg5[%c0_22, %c0_23] : memref<128x64xf32, #tpu.memory_space<vmem>>, vector<128x64xf32>
    %cst_24 = arith.constant dense<0.000000e+00> : vector<128x64xf32>
    %52 = tpu.matmul %50, %51, %cst_24 {dimension_numbers = #tpu.dot_dimension_numbers<[1], [0], [0], [1], [0, 0, 1, 1], [], []>} : vector<128x128xf32>, vector<128x64xf32>, vector<128x64xf32> -> vector<128x64xf32>
    %53 = tpu.iota {dimensions = array<i32: 0>} : vector<128x2xi32>
    %c6_i32 = arith.constant 6 : i32
    %54 = vector.broadcast %c6_i32 : i32 to vector<128x2xi32>
    %55 = arith.shrsi %53, %54 : vector<128x2xi32>
    %56 = tpu.iota {dimensions = array<i32: 1>} : vector<128x2xi32>
    %57 = arith.cmpi eq, %55, %56 : vector<128x2xi32>
    %58 = arith.extui %57 : vector<128x2xi1> to vector<128x2xi32>
    %59 = arith.sitofp %58 : vector<128x2xi32> to vector<128x2xf32>
    %60 = tpu.iota {dimensions = array<i32: 0>} : vector<2x128xi32>
    %61 = tpu.iota {dimensions = array<i32: 1>} : vector<2x128xi32>
    %c6_i32_25 = arith.constant 6 : i32
    %62 = vector.broadcast %c6_i32_25 : i32 to vector<2x128xi32>
    %63 = arith.shrsi %61, %62 : vector<2x128xi32>
    %64 = arith.cmpi eq, %60, %63 : vector<2x128xi32>
    %65 = arith.extui %64 : vector<2x128xi1> to vector<2x128xi32>
    %66 = arith.sitofp %65 : vector<2x128xi32> to vector<2x128xf32>
    %cst_26 = arith.constant dense<0.000000e+00> : vector<128x64xf32>
    %67 = tpu.matmul %59, %41, %cst_26 {dimension_numbers = #tpu.dot_dimension_numbers<[1], [0], [0], [1], [0, 0, 1, 1], [], []>} : vector<128x2xf32>, vector<2x64xf32>, vector<128x64xf32> -> vector<128x64xf32>
    %68 = tpu.iota {dimensions = array<i32: 0>} : vector<128x64xi32>
    %c63_i32 = arith.constant 63 : i32
    %69 = vector.broadcast %c63_i32 : i32 to vector<128x64xi32>
    %70 = arith.andi %68, %69 : vector<128x64xi32>
    %71 = tpu.iota {dimensions = array<i32: 1>} : vector<128x64xi32>
    %72 = arith.cmpi eq, %70, %71 : vector<128x64xi32>
    %73 = arith.extui %72 : vector<128x64xi1> to vector<128x64xi32>
    %74 = arith.sitofp %73 : vector<128x64xi32> to vector<128x64xf32>
    %75 = arith.mulf %67, %74 : vector<128x64xf32>
    %cst_27 = arith.constant dense<0.000000e+00> : vector<128xf32>
    %76 = vector.multi_reduction <add>, %75, %cst_27 [1] : vector<128x64xf32> to vector<128xf32>
    %77 = vector.shape_cast %76 : vector<128xf32> to vector<128x1xf32>
    %78 = vector.broadcast %77 : vector<128x1xf32> to vector<128x64xf32>
    %79 = arith.addf %52, %78 : vector<128x64xf32>
    %80 = math.tanh %79 : vector<128x64xf32>
    %81 = vector.broadcast %39 : vector<1x64xf32> to vector<128x64xf32>
    %82 = arith.mulf %80, %81 : vector<128x64xf32>
    %cst_28 = arith.constant dense<0.000000e+00> : vector<128xf32>
    %83 = vector.multi_reduction <add>, %82, %cst_28 [1] : vector<128x64xf32> to vector<128xf32>
    %84 = vector.shape_cast %83 : vector<128xf32> to vector<128x1xf32>
    %85 = tpu.iota {dimensions = array<i32: 0>} : vector<128x1xi32>
    %c63_i32_29 = arith.constant 63 : i32
    %86 = vector.broadcast %c63_i32_29 : i32 to vector<128x1xi32>
    %87 = arith.andi %85, %86 : vector<128x1xi32>
    %c49_i32 = arith.constant 49 : i32
    %88 = vector.broadcast %c49_i32 : i32 to vector<128x1xi32>
    %89 = arith.cmpi slt, %87, %88 : vector<128x1xi32>
    %cst_30 = arith.constant -1.000000e+30 : f32
    %90 = vector.broadcast %cst_30 : f32 to vector<128x1xf32>
    %91 = arith.select %89, %84, %90 : vector<128x1xi1>, vector<128x1xf32>
    %cst_31 = arith.constant dense<0xFF800000> : vector<1xf32>
    %92 = vector.multi_reduction <maximumf>, %91, %cst_31 [0] : vector<128x1xf32> to vector<1xf32>
    %93 = vector.shape_cast %92 : vector<1xf32> to vector<1x1xf32>
    %cst_32 = arith.constant dense<0xFF800000> : vector<1xf32>
    %94 = vector.multi_reduction <maximumf>, %49, %cst_32 [0] : vector<2x1xf32> to vector<1xf32>
    %95 = vector.shape_cast %94 : vector<1xf32> to vector<1x1xf32>
    %96 = arith.maximumf %93, %95 : vector<1x1xf32>
    %97 = vector.broadcast %96 : vector<1x1xf32> to vector<128x1xf32>
    %98 = arith.subf %91, %97 : vector<128x1xf32>
    %99 = math.exp %98 : vector<128x1xf32>
    %100 = arith.extui %89 : vector<128x1xi1> to vector<128x1xi32>
    %101 = arith.sitofp %100 : vector<128x1xi32> to vector<128x1xf32>
    %102 = arith.mulf %99, %101 : vector<128x1xf32>
    %103 = vector.broadcast %96 : vector<1x1xf32> to vector<2x1xf32>
    %104 = arith.subf %49, %103 : vector<2x1xf32>
    %105 = math.exp %104 : vector<2x1xf32>
    %cst_33 = arith.constant dense<0.000000e+00> : vector<2x1xf32>
    %106 = tpu.matmul %66, %102, %cst_33 {dimension_numbers = #tpu.dot_dimension_numbers<[1], [0], [0], [1], [0, 0, 1, 1], [], []>} : vector<2x128xf32>, vector<128x1xf32>, vector<2x1xf32> -> vector<2x1xf32>
    %107 = tpu.reciprocal %106 {approx = true} : vector<2x1xf32> -> vector<2x1xf32>
    %108 = arith.addf %106, %105 : vector<2x1xf32>
    %109 = tpu.reciprocal %108 {approx = true} : vector<2x1xf32> -> vector<2x1xf32>
    %110 = arith.mulf %105, %109 : vector<2x1xf32>
    %111 = vector.broadcast %102 : vector<128x1xf32> to vector<128x128xf32>
    %112 = arith.mulf %111, %50 : vector<128x128xf32>
    %cst_34 = arith.constant dense<0.000000e+00> : vector<2x128xf32>
    %113 = tpu.matmul %66, %112, %cst_34 {dimension_numbers = #tpu.dot_dimension_numbers<[1], [0], [0], [1], [0, 0, 1, 1], [], []>} : vector<2x128xf32>, vector<128x128xf32>, vector<2x128xf32> -> vector<2x128xf32>
    %114 = vector.broadcast %107 : vector<2x1xf32> to vector<2x128xf32>
    %115 = arith.mulf %113, %114 : vector<2x128xf32>
    %116 = vector.broadcast %110 : vector<2x1xf32> to vector<2x128xf32>
    %117 = arith.mulf %116, %38 : vector<2x128xf32>
    %cst_35 = arith.constant 1.000000e+00 : f32
    %118 = vector.broadcast %cst_35 : f32 to vector<2x1xf32>
    %119 = arith.subf %118, %110 : vector<2x1xf32>
    %120 = vector.broadcast %119 : vector<2x1xf32> to vector<2x128xf32>
    %121 = arith.mulf %120, %115 : vector<2x128xf32>
    %122 = arith.addf %117, %121 : vector<2x128xf32>
    %123 = arith.addf %122, %37 : vector<2x128xf32>
    %c0_36 = arith.constant 0 : index
    %c0_37 = arith.constant 0 : index
    %124 = vector.load %arg9[%c0_36, %c0_37] : memref<2x128xf32, #tpu.memory_space<vmem>>, vector<2x128xf32>
    tpu.vector_store %arg9[%c0_36, %c0_37], %123 {strides = array<i32>} : memref<2x128xf32, #tpu.memory_space<vmem>>, vector<2x128xf32>,
    %c0_38 = arith.constant 0 : index
    %c0_39 = arith.constant 0 : index
    %125 = vector.load %arg10[%c0_38, %c0_39] : memref<2x128xf32, #tpu.memory_space<vmem>>, vector<2x128xf32>
    tpu.vector_store %arg10[%c0_38, %c0_39], %37 {strides = array<i32>} : memref<2x128xf32, #tpu.memory_space<vmem>>, vector<2x128xf32>,
    %c0_40 = arith.constant 0 : index
    %c0_41 = arith.constant 0 : index
    %126 = vector.load %arg11[%c0_40, %c0_41] : memref<2x128xf32, #tpu.memory_space<vmem>>, vector<2x128xf32>
    tpu.vector_store %arg11[%c0_40, %c0_41], %35 {strides = array<i32>} : memref<2x128xf32, #tpu.memory_space<vmem>>, vector<2x128xf32>,
    return
  }
}

</mosaic_0001>

<llo_original>
// kernel: adaptive_attention_lstm_forward.3
$region0: #{adaptive_attention_lstm_forward.3}
  #allocation0 [shape = 'u32[]', space=smem, size = 0x4, offset = 0x4, fixed_abs, tag = 'smem constant byte address 0x4 - core index']
  #allocation1 [shape = 'u32[144,128]{1,0:T(1,128)}', space=vmem, size = 0x12000, scoped, tag = 'internal scratch']
  %s0 = inlined_call_operand.vmem [shape: bf16[2,128], index: 0, kind: input, shape index: {}]
  %s1 = inlined_call_operand.vmem [shape: bf16[128,1024], index: 1, kind: input, shape index: {}]
  %s2 = inlined_call_operand.hbm [shape: f32[2,1024], index: 2, kind: output, shape index: {}]
  %s3 = sld [smem:[#allocation0]]
  $region64: #{adaptive_attention_lstm_forward.3} parent=0
    _
  %s5 = ssub.s32 1, %s3
  %s6 = scalar_select 0, %s5, %s3
  $region1: #{adaptive_attention_lstm_forward.3} parent=0
    #allocation2 [shape = 'u8[262144]{0}', space=vmem, size = 0x40000, scoped, tag = 'input window, operand 1']
    #allocation3 [shape = 'u8[8192]{0}', space=vmem, size = 0x2000, scoped, tag = 'output window, operand 0']
    #allocation4 [shape = 's32[2]{0}', space=sflag, size = 0x8, scoped, tag = 'scoped memory for adaptive_attention_lstm_forward.3']
    %7 = vsyncpa [#allocation4], 0
    %s8 = scalar_lea.sflag [#allocation4], 1
    %9 = vsyncpa %s8, 0
    loop: start=0, step=1, limit=4
    $region2: #{adaptive_attention_lstm_forward.3} parent=1 // loop_pre_header
      _
    $region3: #{adaptive_attention_lstm_forward.3} parent=1 // loop_header
      %s11 = sphi 0, %s15
      %p12 = scmp.ge.s32.totalorder %s11, 4
      %s19 = sphi 0, %s19
      %s21 = sphi 0, %s19
      %s22 = sphi 0, %s21
      %s36 = sphi 0, %s22
      %s42 = sphi 0, %s44
      %s45 = sphi 0, %s42
      %s46 = sphi 0, %s45
      %s62 = sphi 0, %s46
      %s68 = sphi 0, %s70
      %s71 = sphi 0, %s68
      %s72 = sphi 0, %s71
      %s88 = sphi 0, %s72
    $region4: #{adaptive_attention_lstm_forward.3} parent=1 // loop_header_branch
      %14 = sbr.rel (%p12) target = $region8
    $region5: #{adaptive_attention_lstm_forward.3} parent=1 // loop_body
      %s16 = ssub.s32 %s11, 1
      %s17 = ssub.s32 %s11, 2
      %s18 = sadd.s32 %s11, 1
      %s20 = sadd.s32 %s19, 1
      %p23 = scmp.eq.s32.totalorder %s11, 1
      %p24 = scmp.ne.s32.totalorder %s19, %s21
      %p25 = scmp.eq.s32.totalorder %s11, 0
      %p26 = por %p24, %p25
      %p27 = scmp.ne.s32.totalorder %s19, %s21
      %p28 = scmp.eq.s32.totalorder %s16, 1
      %p29 = por %p27, %p28
      %p30 = scmp.ne.s32.totalorder %s21, %s22
      %p31 = scmp.eq.s32.totalorder %s16, 0
      %p32 = por %p30, %p31
      %p33 = scmp.ne.s32.totalorder %s21, %s22
      %p34 = scmp.eq.s32.totalorder %s17, 1
      %p35 = por %p33, %p34
      %p37 = scmp.ne.s32.totalorder %s22, %s36
      %p38 = scmp.eq.s32.totalorder %s17, 0
      %p39 = por %p37, %p38
      %s40 = ssub.s32 %s11, %s18
      %p41 = scmp.eq.s32.totalorder %s40, 0
      %s43 = sadd.s32 %s42, 1
      %s44 = scalar_select %p41, %s42, %s43
      %p47 = pneg %p41
      %p48 = scmp.eq.s32.totalorder %s11, 1
      %p49 = por %p47, %p48
      %p50 = scmp.ne.s32.totalorder %s42, %s45
      %p51 = scmp.eq.s32.totalorder %s11, 0
      %p52 = por %p50, %p51
      %p53 = scmp.ne.s32.totalorder %s42, %s45
      %p54 = scmp.eq.s32.totalorder %s16, 1
      %p55 = por %p53, %p54
      %p56 = scmp.ne.s32.totalorder %s45, %s46
      %p57 = scmp.eq.s32.totalorder %s16, 0
      %p58 = por %p56, %p57
      %p59 = scmp.ne.s32.totalorder %s45, %s46
      %p60 = scmp.eq.s32.totalorder %s17, 1
      %p61 = por %p59, %p60
      %p63 = scmp.ne.s32.totalorder %s46, %s62
      %p64 = scmp.eq.s32.totalorder %s17, 0
      %p65 = por %p63, %p64
      %s66 = ssub.s32 %s11, %s18
      %p67 = scmp.eq.s32.totalorder %s66, 0
      %s69 = sadd.s32 %s68, 1
      %s70 = scalar_select %p67, %s68, %s69
      %p73 = pneg %p67
      %p74 = scmp.eq.s32.totalorder %s11, 1
      %p75 = por %p73, %p74
      %p76 = scmp.ne.s32.totalorder %s68, %s71
      %p77 = scmp.eq.s32.totalorder %s11, 0
      %p78 = por %p76, %p77
      %p79 = scmp.ne.s32.totalorder %s68, %s71
      %p80 = scmp.eq.s32.totalorder %s16, 1
      %p81 = por %p79, %p80
      %p82 = scmp.ne.s32.totalorder %s71, %s72
      %p83 = scmp.eq.s32.totalorder %s16, 0
      %p84 = por %p82, %p83
      %p85 = scmp.ne.s32.totalorder %s71, %s72
      %p86 = scmp.eq.s32.totalorder %s17, 1
      %p87 = por %p85, %p86
      %p89 = scmp.ne.s32.totalorder %s72, %s88
      %p90 = scmp.eq.s32.totalorder %s17, 0
      %p91 = por %p89, %p90
      %p92 = scmp.le.s32.totalorder 1, %s11
      %p93 = scmp.lt.s32.totalorder %s11, 3
      %p94 = pnand %p92, %p93
      %p95 = pneg %p94
      // Predicated region
      $region9: #{adaptive_attention_lstm_forward.3} parent=5 // pred_check
        _
      $region10: #{adaptive_attention_lstm_forward.3} parent=5 // pred_check_branch
        %97 = sbr.rel (%p94) target = $region12
      $region11: #{adaptive_attention_lstm_forward.3} parent=5 // pred_region
        %s98 = ssub.s32 %s11, 1
        // Predicated region
        $region13: #{adaptive_attention_lstm_forward.3} parent=11 // pred_check
          %p99 = pneg %p32
        $region14: #{adaptive_attention_lstm_forward.3} parent=11 // pred_check_branch
          %101 = sbr.rel (%p99) target = $region16
        $region15: #{adaptive_attention_lstm_forward.3} parent=11 // pred_region
          _
        $region16: #{adaptive_attention_lstm_forward.3} parent=11 // pred_fallthru
          _
      $region12: #{adaptive_attention_lstm_forward.3} parent=5 // pred_fallthru
        _
      %p102 = scmp.lt.s32.totalorder %s11, 2
      // Predicated region
      $region17: #{adaptive_attention_lstm_forward.3} parent=5 // pred_check
        %p103 = pneg %p102
      $region18: #{adaptive_attention_lstm_forward.3} parent=5 // pred_check_branch
        %105 = sbr.rel (%p103) target = $region20
      $region19: #{adaptive_attention_lstm_forward.3} parent=5 // pred_region
        // Predicated region
        $region21: #{adaptive_attention_lstm_forward.3} parent=19 // pred_check
          %p106 = pneg %p52
        $region22: #{adaptive_attention_lstm_forward.3} parent=19 // pred_check_branch
          %108 = sbr.rel (%p106) target = $region24
        $region23: #{adaptive_attention_lstm_forward.3} parent=19 // pred_region
          %s109 = sand.u32 %s42, 1
          %s110 = sand.u32 %s42, 1
          %s111 = smul.addr %s110, 256
          %s112 = scalar_lea.vmem [#allocation2], %s111
          %s113 = smul.u32 4, %s11
          %s114 = smul.addr %s113, 4
          %s115 = scalar_lea.vmem %s1, %s114
          // Predicated region
          $region25: #{adaptive_attention_lstm_forward.3} parent=23 // pred_check
            _
          $region26: #{adaptive_attention_lstm_forward.3} parent=23 // pred_check_branch
            %117 = sbr.rel (0) target = $region28
          $region27: #{adaptive_attention_lstm_forward.3} parent=23 // pred_region
            // Predicated region
            $region29: #{adaptive_attention_lstm_forward.3} parent=27 // pred_check
              _
            $region30: #{adaptive_attention_lstm_forward.3} parent=27 // pred_check_branch
              %119 = sbr.rel (0) target = $region32
            $region31: #{adaptive_attention_lstm_forward.3} parent=27 // pred_region
              loop: start=0, step=1, limit=1
              $region33: #{adaptive_attention_lstm_forward.3} parent=31 // loop_pre_header
                _
              $region34: #{adaptive_attention_lstm_forward.3} parent=31 // loop_header
                %s121 = sphi 0, %s125
                %p122 = scmp.ge.s32.totalorder %s121, 1
                %s126 = sphi %s115, %s115
                %s127 = sphi %s112, %s112
              $region35: #{adaptive_attention_lstm_forward.3} parent=31 // loop_header_branch
                %124 = sbr.rel (%p122) target = $region39
              $region36: #{adaptive_attention_lstm_forward.3} parent=31 // loop_body
                %v128 = vld [vmem:[%s126] sm:$0xff]
                %129 = vst [vmem:[%s127] sm:$0xff] %v128
                %v130 = vld [vmem:[%s126 + $0x8] sm:$0xff]
                %131 = vst [vmem:[%s127 + $0x8] sm:$0xff] %v130
                %v132 = vld [vmem:[%s126 + $0x20] sm:$0xff]
                %133 = vst [vmem:[%s127 + $0x10] sm:$0xff] %v132
                %v134 = vld [vmem:[%s126 + $0x28] sm:$0xff]
                %135 = vst [vmem:[%s127 + $0x18] sm:$0xff] %v134
                %v136 = vld [vmem:[%s126 + $0x40] sm:$0xff]
                %137 = vst [vmem:[%s127 + $0x20] sm:$0xff] %v136
                %v138 = vld [vmem:[%s126 + $0x48] sm:$0xff]
                %139 = vst [vmem:[%s127 + $0x28] sm:$0xff] %v138
                %v140 = vld [vmem:[%s126 + $0x60] sm:$0xff]
                %141 = vst [vmem:[%s127 + $0x30] sm:$0xff] %v140
                %v142 = vld [vmem:[%s126 + $0x68] sm:$0xff]
                %143 = vst [vmem:[%s127 + $0x38] sm:$0xff] %v142
                %v144 = vld [vmem:[%s126 + $0x80] sm:$0xff]
                %145 = vst [vmem:[%s127 + $0x40] sm:$0xff] %v144
                %v146 = vld [vmem:[%s126 + $0x88] sm:$0xff]
                %147 = vst [vmem:[%s127 + $0x48] sm:$0xff] %v146
                %v148 = vld [vmem:[%s126 + $0xa0] sm:$0xff]
                %149 = vst [vmem:[%s127 + $0x50] sm:$0xff] %v148
                %v150 = vld [vmem:[%s126 + $0xa8] sm:$0xff]
                %151 = vst [vmem:[%s127 + $0x58] sm:$0xff] %v150
                %v152 = vld [vmem:[%s126 + $0xc0] sm:$0xff]
                %153 = vst [vmem:[%s127 + $0x60] sm:$0xff] %v152
                %v154 = vld [vmem:[%s126 + $0xc8] sm:$0xff]
                %155 = vst [vmem:[%s127 + $0x68] sm:$0xff] %v154
                %v156 = vld [vmem:[%s126 + $0xe0] sm:$0xff]
                %157 = vst [vmem:[%s127 + $0x70] sm:$0xff] %v156
                %v158 = vld [vmem:[%s126 + $0xe8] sm:$0xff]
                %159 = vst [vmem:[%s127 + $0x78] sm:$0xff] %v158
                %v160 = vld [vmem:[%s126 + $0x100] sm:$0xff]
                %161 = vst [vmem:[%s127 + $0x80] sm:$0xff] %v160
                %v162 = vld [vmem:[%s126 + $0x108] sm:$0xff]
                %163 = vst [vmem:[%s127 + $0x88] sm:$0xff] %v162
                %v164 = vld [vmem:[%s126 + $0x120] sm:$0xff]
                %165 = vst [vmem:[%s127 + $0x90] sm:$0xff] %v164
                %v166 = vld [vmem:[%s126 + $0x128] sm:$0xff]
                %167 = vst [vmem:[%s127 + $0x98] sm:$0xff] %v166
                %v168 = vld [vmem:[%s126 + $0x140] sm:$0xff]
                %169 = vst [vmem:[%s127 + $0xa0] sm:$0xff] %v168
                %v170 = vld [vmem:[%s126 + $0x148] sm:$0xff]
                %171 = vst [vmem:[%s127 + $0xa8] sm:$0xff] %v170
                %v172 = vld [vmem:[%s126 + $0x160] sm:$0xff]
                %173 = vst [vmem:[%s127 + $0xb0] sm:$0xff] %v172
                %v174 = vld [vmem:[%s126 + $0x168] sm:$0xff]
                %175 = vst [vmem:[%s127 + $0xb8] sm:$0xff] %v174
                %v176 = vld [vmem:[%s126 + $0x180] sm:$0xff]
                %177 = vst [vmem:[%s127 + $0xc0] sm:$0xff] %v176
                %v178 = vld [vmem:[%s126 + $0x188] sm:$0xff]
                %179 = vst [vmem:[%s127 + $0xc8] sm:$0xff] %v178
                %v180 = vld [vmem:[%s126 + $0x1a0] sm:$0xff]
                %181 = vst [vmem:[%s127 + $0xd0] sm:$0xff] %v180
                %v182 = vld [vmem:[%s126 + $0x1a8] sm:$0xff]
                %183 = vst [vmem:[%s127 + $0xd8] sm:$0xff] %v182
                %v184 = vld [vmem:[%s126 + $0x1c0] sm:$0xff]
                %185 = vst [vmem:[%s127 + $0xe0] sm:$0xff] %v184
                %v186 = vld [vmem:[%s126 + $0x1c8] sm:$0xff]
                %187 = vst [vmem:[%s127 + $0xe8] sm:$0xff] %v186
                %v188 = vld [vmem:[%s126 + $0x1e0] sm:$0xff]
                %189 = vst [vmem:[%s127 + $0xf0] sm:$0xff] %v188
                %v190 = vld [vmem:[%s126 + $0x1e8] sm:$0xff]
                %191 = vst [vmem:[%s127 + $0xf8] sm:$0xff] %v190
              $region37: #{adaptive_attention_lstm_forward.3} parent=31 // loop_footer
                %s125 = sadd.s32 1, %s121
              $region38: #{adaptive_attention_lstm_forward.3} parent=31 // loop_footer_branch
                %120 = sbr.rel target = $region34
              $region39: #{adaptive_attention_lstm_forward.3} parent=31 // loop_exit
                _
            $region32: #{adaptive_attention_lstm_forward.3} parent=27 // pred_fallthru
              _
            // Predicated region
            $region40: #{adaptive_attention_lstm_forward.3} parent=27 // pred_check
              _
            $region41: #{adaptive_attention_lstm_forward.3} parent=27 // pred_check_branch
              %193 = sbr.rel target = $region43
            $region42: #{adaptive_attention_lstm_forward.3} parent=27 // pred_region
              _
            $region43: #{adaptive_attention_lstm_forward.3} parent=27 // pred_fallthru
              _
          $region28: #{adaptive_attention_lstm_forward.3} parent=23 // pred_fallthru
            _
          %194 = vnop
        $region24: #{adaptive_attention_lstm_forward.3} parent=19 // pred_fallthru
          _
      $region20: #{adaptive_attention_lstm_forward.3} parent=5 // pred_fallthru
        _
      %p195 = scmp.le.s32.totalorder 1, %s11
      %p196 = scmp.lt.s32.totalorder %s11, 3
      %p197 = pnand %p195, %p196
      %p198 = pneg %p197
      // Predicated region
      $region44: #{adaptive_attention_lstm_forward.3} parent=5 // pred_check
        _
      $region45: #{adaptive_attention_lstm_forward.3} parent=5 // pred_check_branch
        %200 = sbr.rel (%p197) target = $region47
      $region46: #{adaptive_attention_lstm_forward.3} parent=5 // pred_region
        %s201 = ssub.s32 %s11, 1
        %s202 = sand.u32 %s45, 1
        %s203 = sand.u32 %s45, 1
        %s204 = smul.addr %s203, 256
        %s205 = scalar_lea.vmem [#allocation2], %s204
        // Predicated region
        $region48: #{adaptive_attention_lstm_forward.3} parent=46 // pred_check
          %p206 = pneg %p58
        $region49: #{adaptive_attention_lstm_forward.3} parent=46 // pred_check_branch
          %208 = sbr.rel (%p206) target = $region51
        $region50: #{adaptive_attention_lstm_forward.3} parent=46 // pred_region
          _
        $region51: #{adaptive_attention_lstm_forward.3} parent=46 // pred_fallthru
          _
        %p209 = pneg %p32
        %p210 = pneg %p29
        %s211 = sand.u32 %s45, 1
        %s212 = sand.u32 %s45, 1
        %s213 = smul.addr %s212, 256
        %s214 = scalar_lea.vmem [#allocation2], %s213
        %p215 = pneg %p58
        %p216 = pneg %p55
        %p217 = pneg %p84
        %p218 = pneg %p81
        %s219 = sand.u32 %s71, 1
        %s220 = scalar_lea.sflag [#allocation4], %s219
        %s221 = sand.u32 %s71, 1
        %s222 = smul.addr %s221, 8
        %s223 = scalar_lea.vmem [#allocation3], %s222
        %s224 = smul.u32 4, %s16
        %s225 = smul.u32 4, %s16
        %v227 = vld [vmem:[%s0] sm:$0x1]
        %v228 = vld [vmem:[%s205] sm:$0xff]
        %v229 = vld [vmem:[%s205 + $0x8] sm:$0xff]
        %v230 = vld [vmem:[%s205 + $0x10] sm:$0xff]
        %v231 = vld [vmem:[%s205 + $0x18] sm:$0xff]
        %v232 = vld [vmem:[%s205 + $0x20] sm:$0xff]
        %v233 = vld [vmem:[%s205 + $0x28] sm:$0xff]
        %v234 = vld [vmem:[%s205 + $0x30] sm:$0xff]
        %v235 = vld [vmem:[%s205 + $0x38] sm:$0xff]
        %v236 = vld [vmem:[%s205 + $0x40] sm:$0xff]
        %v237 = vld [vmem:[%s205 + $0x48] sm:$0xff]
        %v238 = vld [vmem:[%s205 + $0x50] sm:$0xff]
        %v239 = vld [vmem:[%s205 + $0x58] sm:$0xff]
        %v240 = vld [vmem:[%s205 + $0x60] sm:$0xff]
        %v241 = vld [vmem:[%s205 + $0x68] sm:$0xff]
        %v242 = vld [vmem:[%s205 + $0x70] sm:$0xff]
        %v243 = vld [vmem:[%s205 + $0x78] sm:$0xff]
        %v244 = vld [vmem:[%s205 + $0x80] sm:$0xff]
        %v245 = vld [vmem:[%s205 + $0x88] sm:$0xff]
        %v246 = vld [vmem:[%s205 + $0x90] sm:$0xff]
        %v247 = vld [vmem:[%s205 + $0x98] sm:$0xff]
        %v248 = vld [vmem:[%s205 + $0xa0] sm:$0xff]
        %v249 = vld [vmem:[%s205 + $0xa8] sm:$0xff]
        %v250 = vld [vmem:[%s205 + $0xb0] sm:$0xff]
        %v251 = vld [vmem:[%s205 + $0xb8] sm:$0xff]
        %v252 = vld [vmem:[%s205 + $0xc0] sm:$0xff]
        %v253 = vld [vmem:[%s205 + $0xc8] sm:$0xff]
        %v254 = vld [vmem:[%s205 + $0xd0] sm:$0xff]
        %v255 = vld [vmem:[%s205 + $0xd8] sm:$0xff]
        %v256 = vld [vmem:[%s205 + $0xe0] sm:$0xff]
        %v257 = vld [vmem:[%s205 + $0xe8] sm:$0xff]
        %v258 = vld [vmem:[%s205 + $0xf0] sm:$0xff]
        %v259 = vld [vmem:[%s205 + $0xf8] sm:$0xff]
        %v292 = vunpack.c.l.b16 %v228
        %v293 = vunpack.c.h.b16 %v228
        %v294 = vunpack.c.l.b16 %v229
        %v295 = vunpack.c.h.b16 %v229
        %v296 = vunpack.c.l.b16 %v230
        %v297 = vunpack.c.h.b16 %v230
        %v298 = vunpack.c.l.b16 %v231
        %v299 = vunpack.c.h.b16 %v231
        %v300 = vunpack.c.l.b16 %v232
        %v301 = vunpack.c.h.b16 %v232
        %v302 = vunpack.c.l.b16 %v233
        %v303 = vunpack.c.h.b16 %v233
        %v304 = vunpack.c.l.b16 %v234
        %v305 = vunpack.c.h.b16 %v234
        %v306 = vunpack.c.l.b16 %v235
        %v307 = vunpack.c.h.b16 %v235
        %v308 = vunpack.c.l.b16 %v236
        %v309 = vunpack.c.h.b16 %v236
        %v310 = vunpack.c.l.b16 %v237
        %v311 = vunpack.c.h.b16 %v237
        %v312 = vunpack.c.l.b16 %v238
        %v313 = vunpack.c.h.b16 %v238
        %v314 = vunpack.c.l.b16 %v239
        %v315 = vunpack.c.h.b16 %v239
        %v316 = vunpack.c.l.b16 %v240
        %v317 = vunpack.c.h.b16 %v240
        %v318 = vunpack.c.l.b16 %v241
        %v319 = vunpack.c.h.b16 %v241
        %v320 = vunpack.c.l.b16 %v242
        %v321 = vunpack.c.h.b16 %v242
        %v322 = vunpack.c.l.b16 %v243
        %v323 = vunpack.c.h.b16 %v243
        %v324 = vunpack.c.l.b16 %v244
        %v325 = vunpack.c.h.b16 %v244
        %v326 = vunpack.c.l.b16 %v245
        %v327 = vunpack.c.h.b16 %v245
        %v328 = vunpack.c.l.b16 %v246
        %v329 = vunpack.c.h.b16 %v246
        %v330 = vunpack.c.l.b16 %v247
        %v331 = vunpack.c.h.b16 %v247
        %v332 = vunpack.c.l.b16 %v248
        %v333 = vunpack.c.h.b16 %v248
        %v334 = vunpack.c.l.b16 %v249
        %v335 = vunpack.c.h.b16 %v249
        %v336 = vunpack.c.l.b16 %v250
        %v337 = vunpack.c.h.b16 %v250
        %v338 = vunpack.c.l.b16 %v251
        %v339 = vunpack.c.h.b16 %v251
        %v340 = vunpack.c.l.b16 %v252
        %v341 = vunpack.c.h.b16 %v252
        %v342 = vunpack.c.l.b16 %v253
        %v343 = vunpack.c.h.b16 %v253
        %v344 = vunpack.c.l.b16 %v254
        %v345 = vunpack.c.h.b16 %v254
        %v346 = vunpack.c.l.b16 %v255
        %v347 = vunpack.c.h.b16 %v255
        %v348 = vunpack.c.l.b16 %v256
        %v349 = vunpack.c.h.b16 %v256
        %v350 = vunpack.c.l.b16 %v257
        %v351 = vunpack.c.h.b16 %v257
        %v352 = vunpack.c.l.b16 %v258
        %v353 = vunpack.c.h.b16 %v258
        %v354 = vunpack.c.l.b16 %v259
        %v355 = vunpack.c.h.b16 %v259
        %v356 = vpack.c.b16 %v296, %v292
        %v357 = vpack.c.b16 %v297, %v293
        %v358 = vpack.c.b16 %v298, %v294
        %v359 = vpack.c.b16 %v299, %v295
        %v360 = vpack.c.b16 %v304, %v300
        %v361 = vpack.c.b16 %v305, %v301
        %v362 = vpack.c.b16 %v306, %v302
        %v363 = vpack.c.b16 %v307, %v303
        %v364 = vpack.c.b16 %v312, %v308
        %v365 = vpack.c.b16 %v313, %v309
        %v366 = vpack.c.b16 %v314, %v310
        %v367 = vpack.c.b16 %v315, %v311
        %v368 = vpack.c.b16 %v320, %v316
        %v369 = vpack.c.b16 %v321, %v317
        %v370 = vpack.c.b16 %v322, %v318
        %v371 = vpack.c.b16 %v323, %v319
        %v372 = vpack.c.b16 %v328, %v324
        %v373 = vpack.c.b16 %v329, %v325
        %v374 = vpack.c.b16 %v330, %v326
        %v375 = vpack.c.b16 %v331, %v327
        %v376 = vpack.c.b16 %v336, %v332
        %v377 = vpack.c.b16 %v337, %v333
        %v378 = vpack.c.b16 %v338, %v334
        %v379 = vpack.c.b16 %v339, %v335
        %v380 = vpack.c.b16 %v344, %v340
        %v381 = vpack.c.b16 %v345, %v341
        %v382 = vpack.c.b16 %v346, %v342
        %v383 = vpack.c.b16 %v347, %v343
        %v384 = vpack.c.b16 %v352, %v348
        %v385 = vpack.c.b16 %v353, %v349
        %v386 = vpack.c.b16 %v354, %v350
        %v387 = vpack.c.b16 %v355, %v351
        %420 = vmatprep.subr.bf16.mxu0 %v385
        %421 = vmatpush1.bf16.msra.mxu0 %v384
        %422 = vmatprep.subr.bf16.mxu0 %v381
        %423 = vmatpush1.bf16.msra.mxu0 %v380
        %424 = vmatprep.subr.bf16.mxu0 %v377
        %425 = vmatpush1.bf16.msra.mxu0 %v376
        %426 = vmatprep.subr.bf16.mxu0 %v373
        %427 = vmatpush1.bf16.msra.mxu0 %v372
        %428 = vmatprep.subr.bf16.mxu0 %v369
        %429 = vmatpush1.bf16.msra.mxu0 %v368
        %430 = vmatprep.subr.bf16.mxu0 %v365
        %431 = vmatpush1.bf16.msra.mxu0 %v364
        %432 = vmatprep.subr.bf16.mxu0 %v361
        %433 = vmatpush1.bf16.msra.mxu0 %v360
        %434 = vmatprep.subr.bf16.mxu0 %v357
        %435 = vmatpush1.bf16.msra.mxu0 %v356
        %436 = vmatprep.subr.bf16.mxu0 0
        %437 = vmatpush2.bf16.msra.mxu0 0
        %438 = vmatprep.subr.bf16.mxu0 0
        %439 = vmatpush2.bf16.msra.mxu0 0
        %440 = vmatprep.subr.bf16.mxu0 0
        %441 = vmatpush2.bf16.msra.mxu0 0
        %442 = vmatprep.subr.bf16.mxu0 0
        %443 = vmatpush2.bf16.msra.mxu0 0
        %444 = vmatprep.subr.bf16.mxu0 0
        %445 = vmatpush2.bf16.msra.mxu0 0
        %446 = vmatprep.subr.bf16.mxu0 0
        %447 = vmatpush2.bf16.msra.mxu0 0
        %448 = vmatprep.subr.bf16.mxu0 0
        %449 = vmatpush2.bf16.msra.mxu0 0
        %450 = vmatprep.subr.bf16.mxu0 0
        %451 = vmatpush2.bf16.msra.mxu0 0
        %452 = vmatprep.mubr.bf16.mxu0 0
        %453 = vmatmul.mubr.bf16.gmra.mxu0 %v227
        %v454 = vpop.f32.mrf.mxu0
        %v455 = vadd.f32 0.0, %v454
        %v456 = vpop.f32.mrf.mxu0
        %v457 = vadd.f32 0.0, %v456
        %v458 = vpop.f32.mrf.mxu0
        %v459 = vpop.f32.mrf.mxu0
        %460 = vdwg.mxu0
        %461 = vmatprep.subr.bf16.mxu0 %v387
        %462 = vmatpush1.bf16.msra.mxu0 %v386
        %463 = vmatprep.subr.bf16.mxu0 %v383
        %464 = vmatpush1.bf16.msra.mxu0 %v382
        %465 = vmatprep.subr.bf16.mxu0 %v379
        %466 = vmatpush1.bf16.msra.mxu0 %v378
        %467 = vmatprep.subr.bf16.mxu0 %v375
        %468 = vmatpush1.bf16.msra.mxu0 %v374
        %469 = vmatprep.subr.bf16.mxu0 %v371
        %470 = vmatpush1.bf16.msra.mxu0 %v370
        %471 = vmatprep.subr.bf16.mxu0 %v367
        %472 = vmatpush1.bf16.msra.mxu0 %v366
        %473 = vmatprep.subr.bf16.mxu0 %v363
        %474 = vmatpush1.bf16.msra.mxu0 %v362
        %475 = vmatprep.subr.bf16.mxu0 %v359
        %476 = vmatpush1.bf16.msra.mxu0 %v358
        %477 = vmatprep.subr.bf16.mxu0 0
        %478 = vmatpush2.bf16.msra.mxu0 0
        %479 = vmatprep.subr.bf16.mxu0 0
        %480 = vmatpush2.bf16.msra.mxu0 0
        %481 = vmatprep.subr.bf16.mxu0 0
        %482 = vmatpush2.bf16.msra.mxu0 0
        %483 = vmatprep.subr.bf16.mxu0 0
        %484 = vmatpush2.bf16.msra.mxu0 0
        %485 = vmatprep.subr.bf16.mxu0 0
        %486 = vmatpush2.bf16.msra.mxu0 0
        %487 = vmatprep.subr.bf16.mxu0 0
        %488 = vmatpush2.bf16.msra.mxu0 0
        %489 = vmatprep.subr.bf16.mxu0 0
        %490 = vmatpush2.bf16.msra.mxu0 0
        %491 = vmatprep.subr.bf16.mxu0 0
        %492 = vmatpush2.bf16.msra.mxu0 0
        %493 = vmatprep.mubr.bf16.mxu0 0
        %494 = vmatmul.mubr.bf16.gmra.mxu0 %v227
        %v495 = vpop.f32.mrf.mxu0
        %v496 = vadd.f32 0.0, %v495
        %v497 = vpop.f32.mrf.mxu0
        %v498 = vadd.f32 0.0, %v497
        %v499 = vpop.f32.mrf.mxu0
        %v500 = vpop.f32.mrf.mxu0
        %501 = vdwg.mxu0
        %v506 = vcombine.low %v455, %v457
        %v507 = vcombine.low %v496, %v498
        %v509 = vunpack.c.l.s4 1983009808
        %v510 = vunpack.c.0.s8 %v509
        %v511 = vlaneseq
        %v512 = vshrl.u32 %v511, 7
        %v513 = vsub.s32 %v510, %v512
        %v514 = vrot.slane %v506, %v513
        %v516 = vunpack.c.l.s4 1983009808
        %v517 = vunpack.c.0.s8 %v516
        %v518 = vlaneseq
        %v519 = vshrl.u32 %v518, 7
        %v520 = vsub.s32 %v517, %v519
        %v521 = vrot.slane %v507, %v520
        %v522 = vcombine.low %v514, %v521
        %524 = vst [vmem:[%s223] sm:$0xff] %v522
        %s525 = sand.u32 %s71, 1
        %s526 = scalar_lea.sflag [#allocation4], %s525
        %s527 = sand.u32 %s71, 1
        %s528 = smul.addr %s527, 8
        %s529 = scalar_lea.vmem [#allocation3], %s528
        // Predicated region
        $region52: #{adaptive_attention_lstm_forward.3} parent=46 // pred_check
          %p530 = pneg %p81
        $region53: #{adaptive_attention_lstm_forward.3} parent=46 // pred_check_branch
          %532 = sbr.rel (%p530) target = $region55
        $region54: #{adaptive_attention_lstm_forward.3} parent=46 // pred_region
          %s533 = smul.u32 4, %s16
          %s535 = ssub.s32 128, 128
          %536 = vsyncadd %s526, %s535
          %s537 = smul.addr %s533, 32
          %s538 = scalar_lea.hbm %s2, %s537
          %s540 = sshll.u32 %s529, 4
          %s541 = int_to_ptr.vmem [resolvable:$true] %s540
          %543 = dma.vmem_to_hbm [thread:$0]  %s541, 128, %s538, %s526
        $region55: #{adaptive_attention_lstm_forward.3} parent=46 // pred_fallthru
          _
      $region47: #{adaptive_attention_lstm_forward.3} parent=5 // pred_fallthru
        _
      %p544 = scmp.le.s32.totalorder 2, %s11
      // Predicated region
      $region56: #{adaptive_attention_lstm_forward.3} parent=5 // pred_check
        %p545 = pneg %p544
      $region57: #{adaptive_attention_lstm_forward.3} parent=5 // pred_check_branch
        %547 = sbr.rel (%p545) target = $region59
      $region58: #{adaptive_attention_lstm_forward.3} parent=5 // pred_region
        %s548 = ssub.s32 %s11, 2
        // Predicated region
        $region60: #{adaptive_attention_lstm_forward.3} parent=58 // pred_check
          %p549 = pneg %p87
        $region61: #{adaptive_attention_lstm_forward.3} parent=58 // pred_check_branch
          %551 = sbr.rel (%p549) target = $region63
        $region62: #{adaptive_attention_lstm_forward.3} parent=58 // pred_region
          %s552 = sand.u32 %s72, 1
          %s553 = scalar_lea.sflag [#allocation4], %s552
          %s554 = sand.u32 %s72, 1
          %s555 = smul.addr %s554, 8
          %s556 = scalar_lea.vmem [#allocation3], %s555
          %557 = dma.done %s553, 128
        $region63: #{adaptive_attention_lstm_forward.3} parent=58 // pred_fallthru
          _
      $region59: #{adaptive_attention_lstm_forward.3} parent=5 // pred_fallthru
        _
    $region6: #{adaptive_attention_lstm_forward.3} parent=1 // loop_footer
      %s15 = sadd.s32 1, %s11
    $region7: #{adaptive_attention_lstm_forward.3} parent=1 // loop_footer_branch
      %10 = sbr.rel target = $region3
    $region8: #{adaptive_attention_lstm_forward.3} parent=1 // loop_exit
      _
    %558 = vsyncpa [#allocation4], 1
    %s559 = scalar_lea.sflag [#allocation4], 1
    %560 = vsyncpa %s559, 1

// kernel: adaptive_attention_lstm_forward.2
$region0: #{adaptive_attention_lstm_forward.2}
  #allocation0 [shape = 'u32[]', space=smem, size = 0x4, offset = 0x4, fixed_abs, tag = 'smem constant byte address 0x4 - core index']
  #allocation1 [shape = 'u32[144,128]{1,0:T(1,128)}', space=vmem, size = 0x12000, scoped, tag = 'internal scratch']
  %s0 = inlined_call_operand.vmem [shape: f32[2,384], index: 0, kind: input, shape index: {}]
  %s1 = inlined_call_operand.vmem [shape: f32[2,128], index: 1, kind: input, shape index: {}]
  %s2 = inlined_call_operand.vmem [shape: f32[128,128], index: 2, kind: input, shape index: {}]
  %s3 = inlined_call_operand.hbm [shape: f32[384,640], index: 3, kind: input, shape index: {}]
  %s4 = inlined_call_operand.vmem [shape: f32[1,640], index: 4, kind: input, shape index: {}]
  %s5 = inlined_call_operand.vmem [shape: f32[128,64], index: 5, kind: input, shape index: {}]
  %s6 = inlined_call_operand.vmem [shape: f32[128,64], index: 6, kind: input, shape index: {}]
  %s7 = inlined_call_operand.vmem [shape: f32[128,64], index: 7, kind: input, shape index: {}]
  %s8 = inlined_call_operand.vmem [shape: f32[1,64], index: 8, kind: input, shape index: {}]
  %s9 = inlined_call_operand.vmem [shape: f32[2,128], index: 9, kind: output, shape index: {0}]
  %s10 = inlined_call_operand.hbm [shape: f32[2,128], index: 10, kind: output, shape index: {1}]
  %s11 = inlined_call_operand.hbm [shape: f32[2,128], index: 11, kind: output, shape index: {2}]
  %12 = xla_tuple %s9, %s10, %s11
  %s13 = sld [smem:[#allocation0]]
  $region66: #{adaptive_attention_lstm_forward.2} parent=0
    _
  %s15 = ssub.s32 1, %s13
  %s16 = scalar_select 0, %s15, %s13
  $region1: #{adaptive_attention_lstm_forward.2} parent=0
    #allocation2 [shape = 'u8[983040]{0}', space=vmem, size = 0xf0000, scoped, tag = 'input window, operand 3, single buffered']
    #allocation3 [shape = 's32[1]{0}', space=sflag, size = 0x4, scoped, tag = 'scoped memory for adaptive_attention_lstm_forward.2']
    #allocation4 [shape = 's32[1]{0}', space=sflag, size = 0x4, scoped, tag = 'scoped memory for adaptive_attention_lstm_forward.2']
    #allocation5 [shape = 'u8[1024]{0}', space=vmem, size = 0x400, scoped, tag = 'output window, operand 1, single buffered']
    #allocation6 [shape = 'u8[1024]{0}', space=vmem, size = 0x400, scoped, tag = 'output window, operand 2, single buffered']
    #allocation7 [shape = 's32[1]{0}', space=sflag, size = 0x4, scoped, tag = 'scoped memory for adaptive_attention_lstm_forward.2']
    %17 = vsyncpa [#allocation3], 0
    %18 = vsyncpa [#allocation4], 0
    %19 = vsyncpa [#allocation7], 0
    // Predicated region
    $region2: #{adaptive_attention_lstm_forward.2} parent=1 // pred_check
      _
    $region3: #{adaptive_attention_lstm_forward.2} parent=1 // pred_check_branch
      %21 = sbr.rel (0) target = $region5
    $region4: #{adaptive_attention_lstm_forward.2} parent=1 // pred_region
      _
    $region5: #{adaptive_attention_lstm_forward.2} parent=1 // pred_fallthru
      _
    // Predicated region
    $region6: #{adaptive_attention_lstm_forward.2} parent=1 // pred_check
      _
    $region7: #{adaptive_attention_lstm_forward.2} parent=1 // pred_check_branch
      %23 = sbr.rel (0) target = $region9
    $region8: #{adaptive_attention_lstm_forward.2} parent=1 // pred_region
      _
    $region9: #{adaptive_attention_lstm_forward.2} parent=1 // pred_fallthru
      _
    // Predicated region
    $region10: #{adaptive_attention_lstm_forward.2} parent=1 // pred_check
      _
    $region11: #{adaptive_attention_lstm_forward.2} parent=1 // pred_check_branch
      %25 = sbr.rel (0) target = $region13
    $region12: #{adaptive_attention_lstm_forward.2} parent=1 // pred_region
      _
    $region13: #{adaptive_attention_lstm_forward.2} parent=1 // pred_fallthru
      _
    // Predicated region
    $region14: #{adaptive_attention_lstm_forward.2} parent=1 // pred_check
      _
    $region15: #{adaptive_attention_lstm_forward.2} parent=1 // pred_check_branch
      %27 = sbr.rel (0) target = $region17
    $region16: #{adaptive_attention_lstm_forward.2} parent=1 // pred_region
      %s29 = ssub.s32 30720, 30720
      %30 = vsyncadd [#allocation3], %s29
      %s31 = sshll.u32 [#allocation2], 4
      %s32 = int_to_ptr.vmem [resolvable:$true] %s31
      %37 = dma.hbm_to_vmem [thread:$0]  %s3, 30720, %s32, [#allocation3], 640, 640, 40
    $region17: #{adaptive_attention_lstm_forward.2} parent=1 // pred_fallthru
      _
    // Predicated region
    $region18: #{adaptive_attention_lstm_forward.2} parent=1 // pred_check
      _
    $region19: #{adaptive_attention_lstm_forward.2} parent=1 // pred_check_branch
      %39 = sbr.rel (0) target = $region21
    $region20: #{adaptive_attention_lstm_forward.2} parent=1 // pred_region
      _
    $region21: #{adaptive_attention_lstm_forward.2} parent=1 // pred_fallthru
      _
    // Predicated region
    $region22: #{adaptive_attention_lstm_forward.2} parent=1 // pred_check
      _
    $region23: #{adaptive_attention_lstm_forward.2} parent=1 // pred_check_branch
      %41 = sbr.rel (0) target = $region25
    $region24: #{adaptive_attention_lstm_forward.2} parent=1 // pred_region
      _
    $region25: #{adaptive_attention_lstm_forward.2} parent=1 // pred_fallthru
      _
    // Predicated region
    $region26: #{adaptive_attention_lstm_forward.2} parent=1 // pred_check
      _
    $region27: #{adaptive_attention_lstm_forward.2} parent=1 // pred_check_branch
      %43 = sbr.rel (0) target = $region29
    $region28: #{adaptive_attention_lstm_forward.2} parent=1 // pred_region
      _
    $region29: #{adaptive_attention_lstm_forward.2} parent=1 // pred_fallthru
      _
    // Predicated region
    $region30: #{adaptive_attention_lstm_forward.2} parent=1 // pred_check
      _
    $region31: #{adaptive_attention_lstm_forward.2} parent=1 // pred_check_branch
      %45 = sbr.rel (0) target = $region33
    $region32: #{adaptive_attention_lstm_forward.2} parent=1 // pred_region
      _
    $region33: #{adaptive_attention_lstm_forward.2} parent=1 // pred_fallthru
      _
    // Predicated region
    $region34: #{adaptive_attention_lstm_forward.2} parent=1 // pred_check
      _
    $region35: #{adaptive_attention_lstm_forward.2} parent=1 // pred_check_branch
      %47 = sbr.rel (0) target = $region37
    $region36: #{adaptive_attention_lstm_forward.2} parent=1 // pred_region
      _
    $region37: #{adaptive_attention_lstm_forward.2} parent=1 // pred_fallthru
      _
    // Predicated region
    $region38: #{adaptive_attention_lstm_forward.2} parent=1 // pred_check
      _
    $region39: #{adaptive_attention_lstm_forward.2} parent=1 // pred_check_branch
      %49 = sbr.rel (0) target = $region41
    $region40: #{adaptive_attention_lstm_forward.2} parent=1 // pred_region
      %50 = dma.done [#allocation3], 30720
    $region41: #{adaptive_attention_lstm_forward.2} parent=1 // pred_fallthru
      _
    %v51 = vld [vmem:[%s0] sm:$0x3f]
    %v52 = vld [vmem:[#allocation2] sm:$0xff]
    %v53 = vld [vmem:[#allocation2 + $0x8] sm:$0xff]
    %v54 = vld [vmem:[#allocation2 + $0x10] sm:$0xff]
    %v55 = vld [vmem:[#allocation2 + $0x18] sm:$0xff]
    %v56 = vld [vmem:[#allocation2 + $0x20] sm:$0xff]
    %v57 = vld [vmem:[#allocation2 + $0x28] sm:$0xff]
    %v58 = vld [vmem:[#allocation2 + $0x30] sm:$0xff]
    %v59 = vld [vmem:[#allocation2 + $0x38] sm:$0xff]
    %v60 = vld [vmem:[#allocation2 + $0x40] sm:$0xff]
    %v61 = vld [vmem:[#allocation2 + $0x48] sm:$0xff]
    %v62 = vld [vmem:[#allocation2 + $0x50] sm:$0xff]
    %v63 = vld [vmem:[#allocation2 + $0x58] sm:$0xff]
    %v64 = vld [vmem:[#allocation2 + $0x60] sm:$0xff]
    %v65 = vld [vmem:[#allocation2 + $0x68] sm:$0xff]
    %v66 = vld [vmem:[#allocation2 + $0x70] sm:$0xff]
    %v67 = vld [vmem:[#allocation2 + $0x78] sm:$0xff]
    %v68 = vld [vmem:[#allocation2 + $0x80] sm:$0xff]
    %v69 = vld [vmem:[#allocation2 + $0x88] sm:$0xff]
    %v70 = vld [vmem:[#allocation2 + $0x90] sm:$0xff]
    %v71 = vld [vmem:[#allocation2 + $0x98] sm:$0xff]
    %v72 = vld [vmem:[#allocation2 + $0xa0] sm:$0xff]
    %v73 = vld [vmem:[#allocation2 + $0xa8] sm:$0xff]
    %v74 = vld [vmem:[#allocation2 + $0xb0] sm:$0xff]
    %v75 = vld [vmem:[#allocation2 + $0xb8] sm:$0xff]
    %v76 = vld [vmem:[#allocation2 + $0xc0] sm:$0xff]
    %v77 = vld [vmem:[#allocation2 + $0xc8] sm:$0xff]
    %v78 = vld [vmem:[#allocation2 + $0xd0] sm:$0xff]
    %v79 = vld [vmem:[#allocation2 + $0xd8] sm:$0xff]
    %v80 = vld [vmem:[#allocation2 + $0xe0] sm:$0xff]
    %v81 = vld [vmem:[#allocation2 + $0xe8] sm:$0xff]
    %v82 = vld [vmem:[#allocation2 + $0xf0] sm:$0xff]
    %v83 = vld [vmem:[#allocation2 + $0xf8] sm:$0xff]
    %v84 = vld [vmem:[#allocation2 + $0x100] sm:$0xff]
    %v85 = vld [vmem:[#allocation2 + $0x108] sm:$0xff]
    %v86 = vld [vmem:[#allocation2 + $0x110] sm:$0xff]
    %v87 = vld [vmem:[#allocation2 + $0x118] sm:$0xff]
    %v88 = vld [vmem:[#allocation2 + $0x120] sm:$0xff]
    %v89 = vld [vmem:[#allocation2 + $0x128] sm:$0xff]
    %v90 = vld [vmem:[#allocation2 + $0x130] sm:$0xff]
    %v91 = vld [vmem:[#allocation2 + $0x138] sm:$0xff]
    %v92 = vld [vmem:[#allocation2 + $0x140] sm:$0xff]
    %v93 = vld [vmem:[#allocation2 + $0x148] sm:$0xff]
    %v94 = vld [vmem:[#allocation2 + $0x150] sm:$0xff]
    %v95 = vld [vmem:[#allocation2 + $0x158] sm:$0xff]
    %v96 = vld [vmem:[#allocation2 + $0x160] sm:$0xff]
    %v97 = vld [vmem:[#allocation2 + $0x168] sm:$0xff]
    %v98 = vld [vmem:[#allocation2 + $0x170] sm:$0xff]
    %v99 = vld [vmem:[#allocation2 + $0x178] sm:$0xff]
    %v100 = vld [vmem:[#allocation2 + $0x180] sm:$0xff]
    %v101 = vld [vmem:[#allocation2 + $0x188] sm:$0xff]
    %v102 = vld [vmem:[#allocation2 + $0x190] sm:$0xff]
    %v103 = vld [vmem:[#allocation2 + $0x198] sm:$0xff]
    %v104 = vld [vmem:[#allocation2 + $0x1a0] sm:$0xff]
    %v105 = vld [vmem:[#allocation2 + $0x1a8] sm:$0xff]
    %v106 = vld [vmem:[#allocation2 + $0x1b0] sm:$0xff]
    %v107 = vld [vmem:[#allocation2 + $0x1b8] sm:$0xff]
    %v108 = vld [vmem:[#allocation2 + $0x1c0] sm:$0xff]
    %v109 = vld [vmem:[#allocation2 + $0x1c8] sm:$0xff]
    %v110 = vld [vmem:[#allocation2 + $0x1d0] sm:$0xff]
    %v111 = vld [vmem:[#allocation2 + $0x1d8] sm:$0xff]
    %v112 = vld [vmem:[#allocation2 + $0x1e0] sm:$0xff]
    %v113 = vld [vmem:[#allocation2 + $0x1e8] sm:$0xff]
    %v114 = vld [vmem:[#allocation2 + $0x1f0] sm:$0xff]
    %v115 = vld [vmem:[#allocation2 + $0x1f8] sm:$0xff]
    %v116 = vld [vmem:[#allocation2 + $0x200] sm:$0xff]
    %v117 = vld [vmem:[#allocation2 + $0x208] sm:$0xff]
    %v118 = vld [vmem:[#allocation2 + $0x210] sm:$0xff]
    %v119 = vld [vmem:[#allocation2 + $0x218] sm:$0xff]
    %v120 = vld [vmem:[#allocation2 + $0x220] sm:$0xff]
    %v121 = vld [vmem:[#allocation2 + $0x228] sm:$0xff]
    %v122 = vld [vmem:[#allocation2 + $0x230] sm:$0xff]
    %v123 = vld [vmem:[#allocation2 + $0x238] sm:$0xff]
    %v124 = vld [vmem:[#allocation2 + $0x240] sm:$0xff]
    %v125 = vld [vmem:[#allocation2 + $0x248] sm:$0xff]
    %v126 = vld [vmem:[#allocation2 + $0x250] sm:$0xff]
    %v127 = vld [vmem:[#allocation2 + $0x258] sm:$0xff]
    %v128 = vld [vmem:[#allocation2 + $0x260] sm:$0xff]
    %v129 = vld [vmem:[#allocation2 + $0x268] sm:$0xff]
    %v130 = vld [vmem:[#allocation2 + $0x270] sm:$0xff]
    %v131 = vld [vmem:[#allocation2 + $0x278] sm:$0xff]
    %v132 = vld [vmem:[#allocation2 + $0x280] sm:$0xff]
    %v133 = vld [vmem:[#allocation2 + $0x288] sm:$0xff]
    %v134 = vld [vmem:[#allocation2 + $0x290] sm:$0xff]
    %v135 = vld [vmem:[#allocation2 + $0x298] sm:$0xff]
    %v136 = vld [vmem:[#allocation2 + $0x2a0] sm:$0xff]
    %v137 = vld [vmem:[#allocation2 + $0x2a8] sm:$0xff]
    %v138 = vld [vmem:[#allocation2 + $0x2b0] sm:$0xff]
    %v139 = vld [vmem:[#allocation2 + $0x2b8] sm:$0xff]
    %v140 = vld [vmem:[#allocation2 + $0x2c0] sm:$0xff]
    %v141 = vld [vmem:[#allocation2 + $0x2c8] sm:$0xff]
    %v142 = vld [vmem:[#allocation2 + $0x2d0] sm:$0xff]
    %v143 = vld [vmem:[#allocation2 + $0x2d8] sm:$0xff]
    %v144 = vld [vmem:[#allocation2 + $0x2e0] sm:$0xff]
    %v145 = vld [vmem:[#allocation2 + $0x2e8] sm:$0xff]
    %v146 = vld [vmem:[#allocation2 + $0x2f0] sm:$0xff]
    %v147 = vld [vmem:[#allocation2 + $0x2f8] sm:$0xff]
    %v148 = vld [vmem:[#allocation2 + $0x300] sm:$0xff]
    %v149 = vld [vmem:[#allocation2 + $0x308] sm:$0xff]
    %v150 = vld [vmem:[#allocation2 + $0x310] sm:$0xff]
    %v151 = vld [vmem:[#allocation2 + $0x318] sm:$0xff]
    %v152 = vld [vmem:[#allocation2 + $0x320] sm:$0xff]
    %v153 = vld [vmem:[#allocation2 + $0x328] sm:$0xff]
    %v154 = vld [vmem:[#allocation2 + $0x330] sm:$0xff]
    %v155 = vld [vmem:[#allocation2 + $0x338] sm:$0xff]
    %v156 = vld [vmem:[#allocation2 + $0x340] sm:$0xff]
    %v157 = vld [vmem:[#allocation2 + $0x348] sm:$0xff]
    %v158 = vld [vmem:[#allocation2 + $0x350] sm:$0xff]
    %v159 = vld [vmem:[#allocation2 + $0x358] sm:$0xff]
    %v160 = vld [vmem:[#allocation2 + $0x360] sm:$0xff]
    %v161 = vld [vmem:[#allocation2 + $0x368] sm:$0xff]
    %v162 = vld [vmem:[#allocation2 + $0x370] sm:$0xff]
    %v163 = vld [vmem:[#allocation2 + $0x378] sm:$0xff]
    %v164 = vld [vmem:[#allocation2 + $0x380] sm:$0xff]
    %v165 = vld [vmem:[#allocation2 + $0x388] sm:$0xff]
    %v166 = vld [vmem:[#allocation2 + $0x390] sm:$0xff]
    %v167 = vld [vmem:[#allocation2 + $0x398] sm:$0xff]
    %v168 = vld [vmem:[#allocation2 + $0x3a0] sm:$0xff]
    %v169 = vld [vmem:[#allocation2 + $0x3a8] sm:$0xff]
    %v170 = vld [vmem:[#allocation2 + $0x3b0] sm:$0xff]
    %v171 = vld [vmem:[#allocation2 + $0x3b8] sm:$0xff]
    %v172 = vld [vmem:[#allocation2 + $0x3c0] sm:$0xff]
    %v173 = vld [vmem:[#allocation2 + $0x3c8] sm:$0xff]
    %v174 = vld [vmem:[#allocation2 + $0x3d0] sm:$0xff]
    %v175 = vld [vmem:[#allocation2 + $0x3d8] sm:$0xff]
    %v176 = vld [vmem:[#allocation2 + $0x3e0] sm:$0xff]
    %v177 = vld [vmem:[#allocation2 + $0x3e8] sm:$0xff]
    %v178 = vld [vmem:[#allocation2 + $0x3f0] sm:$0xff]
    %v179 = vld [vmem:[#allocation2 + $0x3f8] sm:$0xff]
    %v180 = vld [vmem:[#allocation2 + $0x400] sm:$0xff]
    %v181 = vld [vmem:[#allocation2 + $0x408] sm:$0xff]
    %v182 = vld [vmem:[#allocation2 + $0x410] sm:$0xff]
    %v183 = vld [vmem:[#allocation2 + $0x418] sm:$0xff]
    %v184 = vld [vmem:[#allocation2 + $0x420] sm:$0xff]
    %v185 = vld [vmem:[#allocation2 + $0x428] sm:$0xff]
    %v186 = vld [vmem:[#allocation2 + $0x430] sm:$0xff]
    %v187 = vld [vmem:[#allocation2 + $0x438] sm:$0xff]
    %v188 = vld [vmem:[#allocation2 + $0x440] sm:$0xff]
    %v189 = vld [vmem:[#allocation2 + $0x448] sm:$0xff]
    %v190 = vld [vmem:[#allocation2 + $0x450] sm:$0xff]
    %v191 = vld [vmem:[#allocation2 + $0x458] sm:$0xff]
    %v192 = vld [vmem:[#allocation2 + $0x460] sm:$0xff]
    %v193 = vld [vmem:[#allocation2 + $0x468] sm:$0xff]
    %v194 = vld [vmem:[#allocation2 + $0x470] sm:$0xff]
    %v195 = vld [vmem:[#allocation2 + $0x478] sm:$0xff]
    %v196 = vld [vmem:[#allocation2 + $0x480] sm:$0xff]
    %v197 = vld [vmem:[#allocation2 + $0x488] sm:$0xff]
    %v198 = vld [vmem:[#allocation2 + $0x490] sm:$0xff]
    %v199 = vld [vmem:[#allocation2 + $0x498] sm:$0xff]
    %v200 = vld [vmem:[#allocation2 + $0x4a0] sm:$0xff]
    %v201 = vld [vmem:[#allocation2 + $0x4a8] sm:$0xff]
    %v202 = vld [vmem:[#allocation2 + $0x4b0] sm:$0xff]
    %v203 = vld [vmem:[#allocation2 + $0x4b8] sm:$0xff]
    %v204 = vld [vmem:[#allocation2 + $0x4c0] sm:$0xff]
    %v205 = vld [vmem:[#allocation2 + $0x4c8] sm:$0xff]
    %v206 = vld [vmem:[#allocation2 + $0x4d0] sm:$0xff]
    %v207 = vld [vmem:[#allocation2 + $0x4d8] sm:$0xff]
    %v208 = vld [vmem:[#allocation2 + $0x4e0] sm:$0xff]
    %v209 = vld [vmem:[#allocation2 + $0x4e8] sm:$0xff]
    %v210 = vld [vmem:[#allocation2 + $0x4f0] sm:$0xff]
    %v211 = vld [vmem:[#allocation2 + $0x4f8] sm:$0xff]
    %v212 = vld [vmem:[#allocation2 + $0x500] sm:$0xff]
    %v213 = vld [vmem:[#allocation2 + $0x508] sm:$0xff]
    %v214 = vld [vmem:[#allocation2 + $0x510] sm:$0xff]
    %v215 = vld [vmem:[#allocation2 + $0x518] sm:$0xff]
    %v216 = vld [vmem:[#allocation2 + $0x520] sm:$0xff]
    %v217 = vld [vmem:[#allocation2 + $0x528] sm:$0xff]
    %v218 = vld [vmem:[#allocation2 + $0x530] sm:$0xff]
    %v219 = vld [vmem:[#allocation2 + $0x538] sm:$0xff]
    %v220 = vld [vmem:[#allocation2 + $0x540] sm:$0xff]
    %v221 = vld [vmem:[#allocation2 + $0x548] sm:$0xff]
    %v222 = vld [vmem:[#allocation2 + $0x550] sm:$0xff]
    %v223 = vld [vmem:[#allocation2 + $0x558] sm:$0xff]
    %v224 = vld [vmem:[#allocation2 + $0x560] sm:$0xff]
    %v225 = vld [vmem:[#allocation2 + $0x568] sm:$0xff]
    %v226 = vld [vmem:[#allocation2 + $0x570] sm:$0xff]
    %v227 = vld [vmem:[#allocation2 + $0x578] sm:$0xff]
    %v228 = vld [vmem:[#allocation2 + $0x580] sm:$0xff]
    %v229 = vld [vmem:[#allocation2 + $0x588] sm:$0xff]
    %v230 = vld [vmem:[#allocation2 + $0x590] sm:$0xff]
    %v231 = vld [vmem:[#allocation2 + $0x598] sm:$0xff]
    %v232 = vld [vmem:[#allocation2 + $0x5a0] sm:$0xff]
    %v233 = vld [vmem:[#allocation2 + $0x5a8] sm:$0xff]
    %v234 = vld [vmem:[#allocation2 + $0x5b0] sm:$0xff]
    %v235 = vld [vmem:[#allocation2 + $0x5b8] sm:$0xff]
    %v236 = vld [vmem:[#allocation2 + $0x5c0] sm:$0xff]
    %v237 = vld [vmem:[#allocation2 + $0x5c8] sm:$0xff]
    %v238 = vld [vmem:[#allocation2 + $0x5d0] sm:$0xff]
    %v239 = vld [vmem:[#allocation2 + $0x5d8] sm:$0xff]
    %v240 = vld [vmem:[#allocation2 + $0x5e0] sm:$0xff]
    %v241 = vld [vmem:[#allocation2 + $0x5e8] sm:$0xff]
    %v242 = vld [vmem:[#allocation2 + $0x5f0] sm:$0xff]
    %v243 = vld [vmem:[#allocation2 + $0x5f8] sm:$0xff]
    %v244 = vld [vmem:[#allocation2 + $0x600] sm:$0xff]
    %v245 = vld [vmem:[#allocation2 + $0x608] sm:$0xff]
    %v246 = vld [vmem:[#allocation2 + $0x610] sm:$0xff]
    %v247 = vld [vmem:[#allocation2 + $0x618] sm:$0xff]
    %v248 = vld [vmem:[#allocation2 + $0x620] sm:$0xff]
    %v249 = vld [vmem:[#allocation2 + $0x628] sm:$0xff]
    %v250 = vld [vmem:[#allocation2 + $0x630] sm:$0xff]
    %v251 = vld [vmem:[#allocation2 + $0x638] sm:$0xff]
    %v252 = vld [vmem:[#allocation2 + $0x640] sm:$0xff]
    %v253 = vld [vmem:[#allocation2 + $0x648] sm:$0xff]
    %v254 = vld [vmem:[#allocation2 + $0x650] sm:$0xff]
    %v255 = vld [vmem:[#allocation2 + $0x658] sm:$0xff]
    %v256 = vld [vmem:[#allocation2 + $0x660] sm:$0xff]
    %v257 = vld [vmem:[#allocation2 + $0x668] sm:$0xff]
    %v258 = vld [vmem:[#allocation2 + $0x670] sm:$0xff]
    %v259 = vld [vmem:[#allocation2 + $0x678] sm:$0xff]
    %v260 = vld [vmem:[#allocation2 + $0x680] sm:$0xff]
    %v261 = vld [vmem:[#allocation2 + $0x688] sm:$0xff]
    %v262 = vld [vmem:[#allocation2 + $0x690] sm:$0xff]
    %v263 = vld [vmem:[#allocation2 + $0x698] sm:$0xff]
    %v264 = vld [vmem:[#allocation2 + $0x6a0] sm:$0xff]
    %v265 = vld [vmem:[#allocation2 + $0x6a8] sm:$0xff]
    %v266 = vld [vmem:[#allocation2 + $0x6b0] sm:$0xff]
    %v267 = vld [vmem:[#allocation2 + $0x6b8] sm:$0xff]
    %v268 = vld [vmem:[#allocation2 + $0x6c0] sm:$0xff]
    %v269 = vld [vmem:[#allocation2 + $0x6c8] sm:$0xff]
    %v270 = vld [vmem:[#allocation2 + $0x6d0] sm:$0xff]
    %v271 = vld [vmem:[#allocation2 + $0x6d8] sm:$0xff]
    %v272 = vld [vmem:[#allocation2 + $0x6e0] sm:$0xff]
    %v273 = vld [vmem:[#allocation2 + $0x6e8] sm:$0xff]
    %v274 = vld [vmem:[#allocation2 + $0x6f0] sm:$0xff]
    %v275 = vld [vmem:[#allocation2 + $0x6f8] sm:$0xff]
    %v276 = vld [vmem:[#allocation2 + $0x700] sm:$0xff]
    %v277 = vld [vmem:[#allocation2 + $0x708] sm:$0xff]
    %v278 = vld [vmem:[#allocation2 + $0x710] sm:$0xff]
    %v279 = vld [vmem:[#allocation2 + $0x718] sm:$0xff]
    %v280 = vld [vmem:[#allocation2 + $0x720] sm:$0xff]
    %v281 = vld [vmem:[#allocation2 + $0x728] sm:$0xff]
    %v282 = vld [vmem:[#allocation2 + $0x730] sm:$0xff]
    %v283 = vld [vmem:[#allocation2 + $0x738] sm:$0xff]
    %v284 = vld [vmem:[#allocation2 + $0x740] sm:$0xff]
    %v285 = vld [vmem:[#allocation2 + $0x748] sm:$0xff]
    %v286 = vld [vmem:[#allocation2 + $0x750] sm:$0xff]
    %v287 = vld [vmem:[#allocation2 + $0x758] sm:$0xff]
    %v288 = vld [vmem:[#allocation2 + $0x760] sm:$0xff]
    %v289 = vld [vmem:[#allocation2 + $0x768] sm:$0xff]
    %v290 = vld [vmem:[#allocation2 + $0x770] sm:$0xff]
    %v291 = vld [vmem:[#allocation2 + $0x778] sm:$0xff]
    %v292 = vld [vmem:[%s4] sm:$0x1f]
    %v294 = vlaneseq
    %v295 = vshrl.u32 %v294, 7
    %v296 = vsub.s32 0, %v295
    %v297 = vrot.slane %v292, %v296
    %v298 = vlaneseq
    %v299 = vshrl.u32 %v298, 7
    %v300 = vsub.s32 1, %v299
    %v301 = vrot.slane %v292, %v300
    %v302 = vlaneseq
    %v303 = vshrl.u32 %v302, 7
    %v304 = vsub.s32 2, %v303
    %v305 = vrot.slane %v292, %v304
    %v306 = vlaneseq
    %v307 = vshrl.u32 %v306, 7
    %v308 = vsub.s32 3, %v307
    %v309 = vrot.slane %v292, %v308
    %v310 = vlaneseq
    %v311 = vshrl.u32 %v310, 7
    %v312 = vsub.s32 4, %v311
    %v313 = vrot.slane %v292, %v312
    %v320 = vcombine.high %v51, %v51
    %v322 = vunpack.c.l.s4 1983009808
    %v323 = vunpack.c.0.s8 %v322
    %v324 = vlaneseq
    %v325 = vshrl.u32 %v324, 7
    %v326 = vsub.s32 %v323, %v325
    %v327 = vrot.slane %v51, %v326
    %v329 = vunpack.c.l.s4 1983009808
    %v330 = vunpack.c.0.s8 %v329
    %v331 = vlaneseq
    %v332 = vshrl.u32 %v331, 7
    %v333 = vsub.s32 %v330, %v332
    %v334 = vrot.slane %v320, %v333
    %v335 = vcombine.high %v327, %v327
    %339 = vmatprep.subr.mxu0 %v128
    %340 = vmatpush1.msra.mxu0 %v127
    %341 = vmatprep.subr.mxu0 %v123
    %342 = vmatpush1.msra.mxu0 %v122
    %343 = vmatprep.subr.mxu0 %v118
    %344 = vmatpush1.msra.mxu0 %v117
    %345 = vmatprep.subr.mxu0 %v113
    %346 = vmatpush1.msra.mxu0 %v112
    %347 = vmatprep.subr.mxu0 %v108
    %348 = vmatpush1.msra.mxu0 %v107
    %349 = vmatprep.subr.mxu0 %v103
    %350 = vmatpush1.msra.mxu0 %v102
    %351 = vmatprep.subr.mxu0 %v98
    %352 = vmatpush1.msra.mxu0 %v97
    %353 = vmatprep.subr.mxu0 %v93
    %354 = vmatpush1.msra.mxu0 %v92
    %355 = vmatprep.subr.mxu0 %v88
    %356 = vmatpush1.msra.mxu0 %v87
    %357 = vmatprep.subr.mxu0 %v83
    %358 = vmatpush1.msra.mxu0 %v82
    %359 = vmatprep.subr.mxu0 %v78
    %360 = vmatpush1.msra.mxu0 %v77
    %361 = vmatprep.subr.mxu0 %v73
    %362 = vmatpush1.msra.mxu0 %v72
    %363 = vmatprep.subr.mxu0 %v68
    %364 = vmatpush1.msra.mxu0 %v67
    %365 = vmatprep.subr.mxu0 %v63
    %366 = vmatpush1.msra.mxu0 %v62
    %367 = vmatprep.subr.mxu0 %v58
    %368 = vmatpush1.msra.mxu0 %v57
    %369 = vmatprep.subr.mxu0 %v53
    %370 = vmatpush1.msra.mxu0 %v52
    %371 = vmatprep.subr.mxu0 %v208
    %372 = vmatpush2.msra.mxu0 %v207
    %373 = vmatprep.subr.mxu0 %v203
    %374 = vmatpush2.msra.mxu0 %v202
    %375 = vmatprep.subr.mxu0 %v198
    %376 = vmatpush2.msra.mxu0 %v197
    %377 = vmatprep.subr.mxu0 %v193
    %378 = vmatpush2.msra.mxu0 %v192
    %379 = vmatprep.subr.mxu0 %v188
    %380 = vmatpush2.msra.mxu0 %v187
    %381 = vmatprep.subr.mxu0 %v183
    %382 = vmatpush2.msra.mxu0 %v182
    %383 = vmatprep.subr.mxu0 %v178
    %384 = vmatpush2.msra.mxu0 %v177
    %385 = vmatprep.subr.mxu0 %v173
    %386 = vmatpush2.msra.mxu0 %v172
    %387 = vmatprep.subr.mxu0 %v168
    %388 = vmatpush2.msra.mxu0 %v167
    %389 = vmatprep.subr.mxu0 %v163
    %390 = vmatpush2.msra.mxu0 %v162
    %391 = vmatprep.subr.mxu0 %v158
    %392 = vmatpush2.msra.mxu0 %v157
    %393 = vmatprep.subr.mxu0 %v153
    %394 = vmatpush2.msra.mxu0 %v152
    %395 = vmatprep.subr.mxu0 %v148
    %396 = vmatpush2.msra.mxu0 %v147
    %397 = vmatprep.subr.mxu0 %v143
    %398 = vmatpush2.msra.mxu0 %v142
    %399 = vmatprep.subr.mxu0 %v138
    %400 = vmatpush2.msra.mxu0 %v137
    %401 = vmatprep.subr.mxu0 %v133
    %402 = vmatpush2.msra.mxu0 %v132
    %403 = vmatprep.mubr.f32.mxu0 %v335
    %404 = vmatmul.mubr.f32.gmra.mxu0 %v327
    %v405 = vpop.f32.mrf.mxu0
    %v406 = vadd.f32 %v297, %v405
    %v407 = vpop.f32.mrf.mxu0
    %v408 = vadd.f32 %v301, %v407
    %409 = vdwg.mxu0
    %410 = vmatprep.subr.mxu0 %v288
    %411 = vmatpush1.msra.mxu0 %v287
    %412 = vmatprep.subr.mxu0 %v283
    %413 = vmatpush1.msra.mxu0 %v282
    %414 = vmatprep.subr.mxu0 %v278
    %415 = vmatpush1.msra.mxu0 %v277
    %416 = vmatprep.subr.mxu0 %v273
    %417 = vmatpush1.msra.mxu0 %v272
    %418 = vmatprep.subr.mxu0 %v268
    %419 = vmatpush1.msra.mxu0 %v267
    %420 = vmatprep.subr.mxu0 %v263
    %421 = vmatpush1.msra.mxu0 %v262
    %422 = vmatprep.subr.mxu0 %v258
    %423 = vmatpush1.msra.mxu0 %v257
    %424 = vmatprep.subr.mxu0 %v253
    %425 = vmatpush1.msra.mxu0 %v252
    %426 = vmatprep.subr.mxu0 %v248
    %427 = vmatpush1.msra.mxu0 %v247
    %428 = vmatprep.subr.mxu0 %v243
    %429 = vmatpush1.msra.mxu0 %v242
    %430 = vmatprep.subr.mxu0 %v238
    %431 = vmatpush1.msra.mxu0 %v237
    %432 = vmatprep.subr.mxu0 %v233
    %433 = vmatpush1.msra.mxu0 %v232
    %434 = vmatprep.subr.mxu0 %v228
    %435 = vmatpush1.msra.mxu0 %v227
    %436 = vmatprep.subr.mxu0 %v223
    %437 = vmatpush1.msra.mxu0 %v222
    %438 = vmatprep.subr.mxu0 %v218
    %439 = vmatpush1.msra.mxu0 %v217
    %440 = vmatprep.subr.mxu0 %v213
    %441 = vmatpush1.msra.mxu0 %v212
    %442 = vmatprep.subr.mxu0 0.0
    %443 = vmatpush2.msra.mxu0 0.0
    %444 = vmatprep.subr.mxu0 0.0
    %445 = vmatpush2.msra.mxu0 0.0
    %446 = vmatprep.subr.mxu0 0.0
    %447 = vmatpush2.msra.mxu0 0.0
    %448 = vmatprep.subr.mxu0 0.0
    %449 = vmatpush2.msra.mxu0 0.0
    %450 = vmatprep.subr.mxu0 0.0
    %451 = vmatpush2.msra.mxu0 0.0
    %452 = vmatprep.subr.mxu0 0.0
    %453 = vmatpush2.msra.mxu0 0.0
    %454 = vmatprep.subr.mxu0 0.0
    %455 = vmatpush2.msra.mxu0 0.0
    %456 = vmatprep.subr.mxu0 0.0
    %457 = vmatpush2.msra.mxu0 0.0
    %458 = vmatprep.subr.mxu0 0.0
    %459 = vmatpush2.msra.mxu0 0.0
    %460 = vmatprep.subr.mxu0 0.0
    %461 = vmatpush2.msra.mxu0 0.0
    %462 = vmatprep.subr.mxu0 0.0
    %463 = vmatpush2.msra.mxu0 0.0
    %464 = vmatprep.subr.mxu0 0.0
    %465 = vmatpush2.msra.mxu0 0.0
    %466 = vmatprep.subr.mxu0 0.0
    %467 = vmatpush2.msra.mxu0 0.0
    %468 = vmatprep.subr.mxu0 0.0
    %469 = vmatpush2.msra.mxu0 0.0
    %470 = vmatprep.subr.mxu0 0.0
    %471 = vmatpush2.msra.mxu0 0.0
    %472 = vmatprep.subr.mxu0 0.0
    %473 = vmatpush2.msra.mxu0 0.0
    %474 = vmatprep.mubr.f32.mxu0 0.0
    %475 = vmatmul.mubr.f32.gmra.mxu0 %v334
    %v476 = vpop.f32.mrf.mxu0
    %v477 = vadd.f32 %v406, %v476
    %v478 = vpop.f32.mrf.mxu0
    %v479 = vadd.f32 %v408, %v478
    %480 = vdwg.mxu0
    %481 = vmatprep.subr.mxu0 %v130
    %482 = vmatpush1.msra.mxu0 %v129
    %483 = vmatprep.subr.mxu0 %v125
    %484 = vmatpush1.msra.mxu0 %v124
    %485 = vmatprep.subr.mxu0 %v120
    %486 = vmatpush1.msra.mxu0 %v119
    %487 = vmatprep.subr.mxu0 %v115
    %488 = vmatpush1.msra.mxu0 %v114
    %489 = vmatprep.subr.mxu0 %v110
    %490 = vmatpush1.msra.mxu0 %v109
    %491 = vmatprep.subr.mxu0 %v105
    %492 = vmatpush1.msra.mxu0 %v104
    %493 = vmatprep.subr.mxu0 %v100
    %494 = vmatpush1.msra.mxu0 %v99
    %495 = vmatprep.subr.mxu0 %v95
    %496 = vmatpush1.msra.mxu0 %v94
    %497 = vmatprep.subr.mxu0 %v90
    %498 = vmatpush1.msra.mxu0 %v89
    %499 = vmatprep.subr.mxu0 %v85
    %500 = vmatpush1.msra.mxu0 %v84
    %501 = vmatprep.subr.mxu0 %v80
    %502 = vmatpush1.msra.mxu0 %v79
    %503 = vmatprep.subr.mxu0 %v75
    %504 = vmatpush1.msra.mxu0 %v74
    %505 = vmatprep.subr.mxu0 %v70
    %506 = vmatpush1.msra.mxu0 %v69
    %507 = vmatprep.subr.mxu0 %v65
    %508 = vmatpush1.msra.mxu0 %v64
    %509 = vmatprep.subr.mxu0 %v60
    %510 = vmatpush1.msra.mxu0 %v59
    %511 = vmatprep.subr.mxu0 %v55
    %512 = vmatpush1.msra.mxu0 %v54
    %513 = vmatprep.subr.mxu0 %v210
    %514 = vmatpush2.msra.mxu0 %v209
    %515 = vmatprep.subr.mxu0 %v205
    %516 = vmatpush2.msra.mxu0 %v204
    %517 = vmatprep.subr.mxu0 %v200
    %518 = vmatpush2.msra.mxu0 %v199
    %519 = vmatprep.subr.mxu0 %v195
    %520 = vmatpush2.msra.mxu0 %v194
    %521 = vmatprep.subr.mxu0 %v190
    %522 = vmatpush2.msra.mxu0 %v189
    %523 = vmatprep.subr.mxu0 %v185
    %524 = vmatpush2.msra.mxu0 %v184
    %525 = vmatprep.subr.mxu0 %v180
    %526 = vmatpush2.msra.mxu0 %v179
    %527 = vmatprep.subr.mxu0 %v175
    %528 = vmatpush2.msra.mxu0 %v174
    %529 = vmatprep.subr.mxu0 %v170
    %530 = vmatpush2.msra.mxu0 %v169
    %531 = vmatprep.subr.mxu0 %v165
    %532 = vmatpush2.msra.mxu0 %v164
    %533 = vmatprep.subr.mxu0 %v160
    %534 = vmatpush2.msra.mxu0 %v159
    %535 = vmatprep.subr.mxu0 %v155
    %536 = vmatpush2.msra.mxu0 %v154
    %537 = vmatprep.subr.mxu0 %v150
    %538 = vmatpush2.msra.mxu0 %v149
    %539 = vmatprep.subr.mxu0 %v145
    %540 = vmatpush2.msra.mxu0 %v144
    %541 = vmatprep.subr.mxu0 %v140
    %542 = vmatpush2.msra.mxu0 %v139
    %543 = vmatprep.subr.mxu0 %v135
    %544 = vmatpush2.msra.mxu0 %v134
    %545 = vmatprep.mubr.f32.mxu0 %v335
    %546 = vmatmul.mubr.f32.gmra.mxu0 %v327
    %v547 = vpop.f32.mrf.mxu0
    %v548 = vadd.f32 %v305, %v547
    %v549 = vpop.f32.mrf.mxu0
    %v550 = vadd.f32 %v309, %v549
    %551 = vdwg.mxu0
    %552 = vmatprep.subr.mxu0 %v290
    %553 = vmatpush1.msra.mxu0 %v289
    %554 = vmatprep.subr.mxu0 %v285
    %555 = vmatpush1.msra.mxu0 %v284
    %556 = vmatprep.subr.mxu0 %v280
    %557 = vmatpush1.msra.mxu0 %v279
    %558 = vmatprep.subr.mxu0 %v275
    %559 = vmatpush1.msra.mxu0 %v274
    %560 = vmatprep.subr.mxu0 %v270
    %561 = vmatpush1.msra.mxu0 %v269
    %562 = vmatprep.subr.mxu0 %v265
    %563 = vmatpush1.msra.mxu0 %v264
    %564 = vmatprep.subr.mxu0 %v260
    %565 = vmatpush1.msra.mxu0 %v259
    %566 = vmatprep.subr.mxu0 %v255
    %567 = vmatpush1.msra.mxu0 %v254
    %568 = vmatprep.subr.mxu0 %v250
    %569 = vmatpush1.msra.mxu0 %v249
    %570 = vmatprep.subr.mxu0 %v245
    %571 = vmatpush1.msra.mxu0 %v244
    %572 = vmatprep.subr.mxu0 %v240
    %573 = vmatpush1.msra.mxu0 %v239
    %574 = vmatprep.subr.mxu0 %v235
    %575 = vmatpush1.msra.mxu0 %v234
    %576 = vmatprep.subr.mxu0 %v230
    %577 = vmatpush1.msra.mxu0 %v229
    %578 = vmatprep.subr.mxu0 %v225
    %579 = vmatpush1.msra.mxu0 %v224
    %580 = vmatprep.subr.mxu0 %v220
    %581 = vmatpush1.msra.mxu0 %v219
    %582 = vmatprep.subr.mxu0 %v215
    %583 = vmatpush1.msra.mxu0 %v214
    %584 = vmatprep.subr.mxu0 0.0
    %585 = vmatpush2.msra.mxu0 0.0
    %586 = vmatprep.subr.mxu0 0.0
    %587 = vmatpush2.msra.mxu0 0.0
    %588 = vmatprep.subr.mxu0 0.0
    %589 = vmatpush2.msra.mxu0 0.0
    %590 = vmatprep.subr.mxu0 0.0
    %591 = vmatpush2.msra.mxu0 0.0
    %592 = vmatprep.subr.mxu0 0.0
    %593 = vmatpush2.msra.mxu0 0.0
    %594 = vmatprep.subr.mxu0 0.0
    %595 = vmatpush2.msra.mxu0 0.0
    %596 = vmatprep.subr.mxu0 0.0
    %597 = vmatpush2.msra.mxu0 0.0
    %598 = vmatprep.subr.mxu0 0.0
    %599 = vmatpush2.msra.mxu0 0.0
    %600 = vmatprep.subr.mxu0 0.0
    %601 = vmatpush2.msra.mxu0 0.0
    %602 = vmatprep.subr.mxu0 0.0
    %603 = vmatpush2.msra.mxu0 0.0
    %604 = vmatprep.subr.mxu0 0.0
    %605 = vmatpush2.msra.mxu0 0.0
    %606 = vmatprep.subr.mxu0 0.0
    %607 = vmatpush2.msra.mxu0 0.0
    %608 = vmatprep.subr.mxu0 0.0
    %609 = vmatpush2.msra.mxu0 0.0
    %610 = vmatprep.subr.mxu0 0.0
    %611 = vmatpush2.msra.mxu0 0.0
    %612 = vmatprep.subr.mxu0 0.0
    %613 = vmatpush2.msra.mxu0 0.0
    %614 = vmatprep.subr.mxu0 0.0
    %615 = vmatpush2.msra.mxu0 0.0
    %616 = vmatprep.mubr.f32.mxu0 0.0
    %617 = vmatmul.mubr.f32.gmra.mxu0 %v334
    %v618 = vpop.f32.mrf.mxu0
    %v619 = vadd.f32 %v548, %v618
    %v620 = vpop.f32.mrf.mxu0
    %v621 = vadd.f32 %v550, %v620
    %622 = vdwg.mxu0
    %623 = vmatprep.subr.mxu0 0.0
    %624 = vmatpush1.msra.mxu0 %v131
    %625 = vmatprep.subr.mxu0 0.0
    %626 = vmatpush1.msra.mxu0 %v126
    %627 = vmatprep.subr.mxu0 0.0
    %628 = vmatpush1.msra.mxu0 %v121
    %629 = vmatprep.subr.mxu0 0.0
    %630 = vmatpush1.msra.mxu0 %v116
    %631 = vmatprep.subr.mxu0 0.0
    %632 = vmatpush1.msra.mxu0 %v111
    %633 = vmatprep.subr.mxu0 0.0
    %634 = vmatpush1.msra.mxu0 %v106
    %635 = vmatprep.subr.mxu0 0.0
    %636 = vmatpush1.msra.mxu0 %v101
    %637 = vmatprep.subr.mxu0 0.0
    %638 = vmatpush1.msra.mxu0 %v96
    %639 = vmatprep.subr.mxu0 0.0
    %640 = vmatpush1.msra.mxu0 %v91
    %641 = vmatprep.subr.mxu0 0.0
    %642 = vmatpush1.msra.mxu0 %v86
    %643 = vmatprep.subr.mxu0 0.0
    %644 = vmatpush1.msra.mxu0 %v81
    %645 = vmatprep.subr.mxu0 0.0
    %646 = vmatpush1.msra.mxu0 %v76
    %647 = vmatprep.subr.mxu0 0.0
    %648 = vmatpush1.msra.mxu0 %v71
    %649 = vmatprep.subr.mxu0 0.0
    %650 = vmatpush1.msra.mxu0 %v66
    %651 = vmatprep.subr.mxu0 0.0
    %652 = vmatpush1.msra.mxu0 %v61
    %653 = vmatprep.subr.mxu0 0.0
    %654 = vmatpush1.msra.mxu0 %v56
    %655 = vmatprep.subr.mxu0 0.0
    %656 = vmatpush2.msra.mxu0 %v211
    %657 = vmatprep.subr.mxu0 0.0
    %658 = vmatpush2.msra.mxu0 %v206
    %659 = vmatprep.subr.mxu0 0.0
    %660 = vmatpush2.msra.mxu0 %v201
    %661 = vmatprep.subr.mxu0 0.0
    %662 = vmatpush2.msra.mxu0 %v196
    %663 = vmatprep.subr.mxu0 0.0
    %664 = vmatpush2.msra.mxu0 %v191
    %665 = vmatprep.subr.mxu0 0.0
    %666 = vmatpush2.msra.mxu0 %v186
    %667 = vmatprep.subr.mxu0 0.0
    %668 = vmatpush2.msra.mxu0 %v181
    %669 = vmatprep.subr.mxu0 0.0
    %670 = vmatpush2.msra.mxu0 %v176
    %671 = vmatprep.subr.mxu0 0.0
    %672 = vmatpush2.msra.mxu0 %v171
    %673 = vmatprep.subr.mxu0 0.0
    %674 = vmatpush2.msra.mxu0 %v166
    %675 = vmatprep.subr.mxu0 0.0
    %676 = vmatpush2.msra.mxu0 %v161
    %677 = vmatprep.subr.mxu0 0.0
    %678 = vmatpush2.msra.mxu0 %v156
    %679 = vmatprep.subr.mxu0 0.0
    %680 = vmatpush2.msra.mxu0 %v151
    %681 = vmatprep.subr.mxu0 0.0
    %682 = vmatpush2.msra.mxu0 %v146
    %683 = vmatprep.subr.mxu0 0.0
    %684 = vmatpush2.msra.mxu0 %v141
    %685 = vmatprep.subr.mxu0 0.0
    %686 = vmatpush2.msra.mxu0 %v136
    %687 = vmatprep.mubr.f32.mxu0 %v335
    %688 = vmatmul.mubr.f32.gmra.mxu0 %v327
    %v689 = vpop.f32.mrf.mxu0
    %v690 = vadd.f32 %v313, %v689
    %v691 = vpop.f32.mrf.mxu0
    %692 = vdwg.mxu0
    %693 = vmatprep.subr.mxu0 0.0
    %694 = vmatpush1.msra.mxu0 %v291
    %695 = vmatprep.subr.mxu0 0.0
    %696 = vmatpush1.msra.mxu0 %v286
    %697 = vmatprep.subr.mxu0 0.0
    %698 = vmatpush1.msra.mxu0 %v281
    %699 = vmatprep.subr.mxu0 0.0
    %700 = vmatpush1.msra.mxu0 %v276
    %701 = vmatprep.subr.mxu0 0.0
    %702 = vmatpush1.msra.mxu0 %v271
    %703 = vmatprep.subr.mxu0 0.0
    %704 = vmatpush1.msra.mxu0 %v266
    %705 = vmatprep.subr.mxu0 0.0
    %706 = vmatpush1.msra.mxu0 %v261
    %707 = vmatprep.subr.mxu0 0.0
    %708 = vmatpush1.msra.mxu0 %v256
    %709 = vmatprep.subr.mxu0 0.0
    %710 = vmatpush1.msra.mxu0 %v251
    %711 = vmatprep.subr.mxu0 0.0
    %712 = vmatpush1.msra.mxu0 %v246
    %713 = vmatprep.subr.mxu0 0.0
    %714 = vmatpush1.msra.mxu0 %v241
    %715 = vmatprep.subr.mxu0 0.0
    %716 = vmatpush1.msra.mxu0 %v236
    %717 = vmatprep.subr.mxu0 0.0
    %718 = vmatpush1.msra.mxu0 %v231
    %719 = vmatprep.subr.mxu0 0.0
    %720 = vmatpush1.msra.mxu0 %v226
    %721 = vmatprep.subr.mxu0 0.0
    %722 = vmatpush1.msra.mxu0 %v221
    %723 = vmatprep.subr.mxu0 0.0
    %724 = vmatpush1.msra.mxu0 %v216
    %725 = vmatprep.subr.mxu0 0.0
    %726 = vmatpush2.msra.mxu0 0.0
    %727 = vmatprep.subr.mxu0 0.0
    %728 = vmatpush2.msra.mxu0 0.0
    %729 = vmatprep.subr.mxu0 0.0
    %730 = vmatpush2.msra.mxu0 0.0
    %731 = vmatprep.subr.mxu0 0.0
    %732 = vmatpush2.msra.mxu0 0.0
    %733 = vmatprep.subr.mxu0 0.0
    %734 = vmatpush2.msra.mxu0 0.0
    %735 = vmatprep.subr.mxu0 0.0
    %736 = vmatpush2.msra.mxu0 0.0
    %737 = vmatprep.subr.mxu0 0.0
    %738 = vmatpush2.msra.mxu0 0.0
    %739 = vmatprep.subr.mxu0 0.0
    %740 = vmatpush2.msra.mxu0 0.0
    %741 = vmatprep.subr.mxu0 0.0
    %742 = vmatpush2.msra.mxu0 0.0
    %743 = vmatprep.subr.mxu0 0.0
    %744 = vmatpush2.msra.mxu0 0.0
    %745 = vmatprep.subr.mxu0 0.0
    %746 = vmatpush2.msra.mxu0 0.0
    %747 = vmatprep.subr.mxu0 0.0
    %748 = vmatpush2.msra.mxu0 0.0
    %749 = vmatprep.subr.mxu0 0.0
    %750 = vmatpush2.msra.mxu0 0.0
    %751 = vmatprep.subr.mxu0 0.0
    %752 = vmatpush2.msra.mxu0 0.0
    %753 = vmatprep.subr.mxu0 0.0
    %754 = vmatpush2.msra.mxu0 0.0
    %755 = vmatprep.subr.mxu0 0.0
    %756 = vmatpush2.msra.mxu0 0.0
    %757 = vmatprep.mubr.f32.mxu0 0.0
    %758 = vmatmul.mubr.f32.gmra.mxu0 %v334
    %v759 = vpop.f32.mrf.mxu0
    %v760 = vadd.f32 %v690, %v759
    %v761 = vpop.f32.mrf.mxu0
    %762 = vdwg.mxu0
    %v763 = vxor.u32 %v477, 2147483648
    %v764 = vmul.f32 %v763, 1.442695
    %v765 = vpow.pop %v764
    %v766 = vadd.f32 %v765, 1.0
    %v767 = vrcp.pop %v766
    %v768 = vmul.f32 1.0, %v767
    %v769 = vxor.u32 %v479, 2147483648
    %v770 = vmul.f32 %v769, 1.442695
    %v771 = vpow.pop %v770
    %v772 = vadd.f32 %v771, 1.0
    %v773 = vrcp.pop %v772
    %v774 = vmul.f32 1.0, %v773
    %v775 = vtanh.pop %v619
    %v776 = vxor.u32 %v621, 2147483648
    %v777 = vmul.f32 %v776, 1.442695
    %v778 = vpow.pop %v777
    %v779 = vadd.f32 %v778, 1.0
    %v780 = vrcp.pop %v779
    %v781 = vmul.f32 1.0, %v780
    %v782 = vxor.u32 %v760, 2147483648
    %v783 = vmul.f32 %v782, 1.442695
    %v784 = vpow.pop %v783
    %v785 = vadd.f32 %v784, 1.0
    %v786 = vrcp.pop %v785
    %v787 = vmul.f32 1.0, %v786
    %v788 = vld [vmem:[%s1] sm:$0x3]
    %v789 = vmul.f32 %v774, %v788
    %v790 = vmul.f32 %v768, %v775
    %v791 = vadd.f32 %v789, %v790
    %v792 = vtanh.pop %v791
    %v793 = vmul.f32 %v781, %v792
    %v794 = vmul.f32 %v787, %v792
    %v795 = vld [vmem:[%s8] sm:$0x1]
    %v796 = vld [vmem:[%s6] sm:$0xff]
    %v797 = vld [vmem:[%s6 + $0x8] sm:$0xff]
    %v798 = vld [vmem:[%s6 + $0x10] sm:$0xff]
    %v799 = vld [vmem:[%s6 + $0x18] sm:$0xff]
    %v800 = vld [vmem:[%s6 + $0x20] sm:$0xff]
    %v801 = vld [vmem:[%s6 + $0x28] sm:$0xff]
    %v802 = vld [vmem:[%s6 + $0x30] sm:$0xff]
    %v803 = vld [vmem:[%s6 + $0x38] sm:$0xff]
    %v804 = vld [vmem:[%s6 + $0x40] sm:$0xff]
    %v805 = vld [vmem:[%s6 + $0x48] sm:$0xff]
    %v806 = vld [vmem:[%s6 + $0x50] sm:$0xff]
    %v807 = vld [vmem:[%s6 + $0x58] sm:$0xff]
    %v808 = vld [vmem:[%s6 + $0x60] sm:$0xff]
    %v809 = vld [vmem:[%s6 + $0x68] sm:$0xff]
    %v810 = vld [vmem:[%s6 + $0x70] sm:$0xff]
    %v811 = vld [vmem:[%s6 + $0x78] sm:$0xff]
    %812 = vmatprep.subr.mxu0 0.0
    %813 = vmatpush1.msra.mxu0 %v811
    %814 = vmatprep.subr.mxu0 0.0
    %815 = vmatpush1.msra.mxu0 %v810
    %816 = vmatprep.subr.mxu0 0.0
    %817 = vmatpush1.msra.mxu0 %v809
    %818 = vmatprep.subr.mxu0 0.0
    %819 = vmatpush1.msra.mxu0 %v808
    %820 = vmatprep.subr.mxu0 0.0
    %821 = vmatpush1.msra.mxu0 %v807
    %822 = vmatprep.subr.mxu0 0.0
    %823 = vmatpush1.msra.mxu0 %v806
    %824 = vmatprep.subr.mxu0 0.0
    %825 = vmatpush1.msra.mxu0 %v805
    %826 = vmatprep.subr.mxu0 0.0
    %827 = vmatpush1.msra.mxu0 %v804
    %828 = vmatprep.subr.mxu0 0.0
    %829 = vmatpush1.msra.mxu0 %v803
    %830 = vmatprep.subr.mxu0 0.0
    %831 = vmatpush1.msra.mxu0 %v802
    %832 = vmatprep.subr.mxu0 0.0
    %833 = vmatpush1.msra.mxu0 %v801
    %834 = vmatprep.subr.mxu0 0.0
    %835 = vmatpush1.msra.mxu0 %v800
    %836 = vmatprep.subr.mxu0 0.0
    %837 = vmatpush1.msra.mxu0 %v799
    %838 = vmatprep.subr.mxu0 0.0
    %839 = vmatpush1.msra.mxu0 %v798
    %840 = vmatprep.subr.mxu0 0.0
    %841 = vmatpush1.msra.mxu0 %v797
    %842 = vmatprep.subr.mxu0 0.0
    %843 = vmatpush1.msra.mxu0 %v796
    %844 = vmatprep.subr.mxu0 0.0
    %845 = vmatpush2.msra.mxu0 0.0
    %846 = vmatprep.subr.mxu0 0.0
    %847 = vmatpush2.msra.mxu0 0.0
    %848 = vmatprep.subr.mxu0 0.0
    %849 = vmatpush2.msra.mxu0 0.0
    %850 = vmatprep.subr.mxu0 0.0
    %851 = vmatpush2.msra.mxu0 0.0
    %852 = vmatprep.subr.mxu0 0.0
    %853 = vmatpush2.msra.mxu0 0.0
    %854 = vmatprep.subr.mxu0 0.0
    %855 = vmatpush2.msra.mxu0 0.0
    %856 = vmatprep.subr.mxu0 0.0
    %857 = vmatpush2.msra.mxu0 0.0
    %858 = vmatprep.subr.mxu0 0.0
    %859 = vmatpush2.msra.mxu0 0.0
    %860 = vmatprep.subr.mxu0 0.0
    %861 = vmatpush2.msra.mxu0 0.0
    %862 = vmatprep.subr.mxu0 0.0
    %863 = vmatpush2.msra.mxu0 0.0
    %864 = vmatprep.subr.mxu0 0.0
    %865 = vmatpush2.msra.mxu0 0.0
    %866 = vmatprep.subr.mxu0 0.0
    %867 = vmatpush2.msra.mxu0 0.0
    %868 = vmatprep.subr.mxu0 0.0
    %869 = vmatpush2.msra.mxu0 0.0
    %870 = vmatprep.subr.mxu0 0.0
    %871 = vmatpush2.msra.mxu0 0.0
    %872 = vmatprep.subr.mxu0 0.0
    %873 = vmatpush2.msra.mxu0 0.0
    %874 = vmatprep.subr.mxu0 0.0
    %875 = vmatpush2.msra.mxu0 0.0
    %876 = vmatprep.mubr.f32.mxu0 0.0
    %877 = vmatmul.mubr.f32.gmra.mxu0 %v793
    %v878 = vpop.f32.mrf.mxu0
    %v879 = vadd.f32 0.0, %v878
    %v880 = vpop.f32.mrf.mxu0
    %881 = vdwg.mxu0
    %v882 = vld [vmem:[%s7] sm:$0xff]
    %v883 = vld [vmem:[%s7 + $0x8] sm:$0xff]
    %v884 = vld [vmem:[%s7 + $0x10] sm:$0xff]
    %v885 = vld [vmem:[%s7 + $0x18] sm:$0xff]
    %v886 = vld [vmem:[%s7 + $0x20] sm:$0xff]
    %v887 = vld [vmem:[%s7 + $0x28] sm:$0xff]
    %v888 = vld [vmem:[%s7 + $0x30] sm:$0xff]
    %v889 = vld [vmem:[%s7 + $0x38] sm:$0xff]
    %v890 = vld [vmem:[%s7 + $0x40] sm:$0xff]
    %v891 = vld [vmem:[%s7 + $0x48] sm:$0xff]
    %v892 = vld [vmem:[%s7 + $0x50] sm:$0xff]
    %v893 = vld [vmem:[%s7 + $0x58] sm:$0xff]
    %v894 = vld [vmem:[%s7 + $0x60] sm:$0xff]
    %v895 = vld [vmem:[%s7 + $0x68] sm:$0xff]
    %v896 = vld [vmem:[%s7 + $0x70] sm:$0xff]
    %v897 = vld [vmem:[%s7 + $0x78] sm:$0xff]
    %898 = vmatprep.subr.mxu0 0.0
    %899 = vmatpush1.msra.mxu0 %v897
    %900 = vmatprep.subr.mxu0 0.0
    %901 = vmatpush1.msra.mxu0 %v896
    %902 = vmatprep.subr.mxu0 0.0
    %903 = vmatpush1.msra.mxu0 %v895
    %904 = vmatprep.subr.mxu0 0.0
    %905 = vmatpush1.msra.mxu0 %v894
    %906 = vmatprep.subr.mxu0 0.0
    %907 = vmatpush1.msra.mxu0 %v893
    %908 = vmatprep.subr.mxu0 0.0
    %909 = vmatpush1.msra.mxu0 %v892
    %910 = vmatprep.subr.mxu0 0.0
    %911 = vmatpush1.msra.mxu0 %v891
    %912 = vmatprep.subr.mxu0 0.0
    %913 = vmatpush1.msra.mxu0 %v890
    %914 = vmatprep.subr.mxu0 0.0
    %915 = vmatpush1.msra.mxu0 %v889
    %916 = vmatprep.subr.mxu0 0.0
    %917 = vmatpush1.msra.mxu0 %v888
    %918 = vmatprep.subr.mxu0 0.0
    %919 = vmatpush1.msra.mxu0 %v887
    %920 = vmatprep.subr.mxu0 0.0
    %921 = vmatpush1.msra.mxu0 %v886
    %922 = vmatprep.subr.mxu0 0.0
    %923 = vmatpush1.msra.mxu0 %v885
    %924 = vmatprep.subr.mxu0 0.0
    %925 = vmatpush1.msra.mxu0 %v884
    %926 = vmatprep.subr.mxu0 0.0
    %927 = vmatpush1.msra.mxu0 %v883
    %928 = vmatprep.subr.mxu0 0.0
    %929 = vmatpush1.msra.mxu0 %v882
    %930 = vmatprep.subr.mxu0 0.0
    %931 = vmatpush2.msra.mxu0 0.0
    %932 = vmatprep.subr.mxu0 0.0
    %933 = vmatpush2.msra.mxu0 0.0
    %934 = vmatprep.subr.mxu0 0.0
    %935 = vmatpush2.msra.mxu0 0.0
    %936 = vmatprep.subr.mxu0 0.0
    %937 = vmatpush2.msra.mxu0 0.0
    %938 = vmatprep.subr.mxu0 0.0
    %939 = vmatpush2.msra.mxu0 0.0
    %940 = vmatprep.subr.mxu0 0.0
    %941 = vmatpush2.msra.mxu0 0.0
    %942 = vmatprep.subr.mxu0 0.0
    %943 = vmatpush2.msra.mxu0 0.0
    %944 = vmatprep.subr.mxu0 0.0
    %945 = vmatpush2.msra.mxu0 0.0
    %946 = vmatprep.subr.mxu0 0.0
    %947 = vmatpush2.msra.mxu0 0.0
    %948 = vmatprep.subr.mxu0 0.0
    %949 = vmatpush2.msra.mxu0 0.0
    %950 = vmatprep.subr.mxu0 0.0
    %951 = vmatpush2.msra.mxu0 0.0
    %952 = vmatprep.subr.mxu0 0.0
    %953 = vmatpush2.msra.mxu0 0.0
    %954 = vmatprep.subr.mxu0 0.0
    %955 = vmatpush2.msra.mxu0 0.0
    %956 = vmatprep.subr.mxu0 0.0
    %957 = vmatpush2.msra.mxu0 0.0
    %958 = vmatprep.subr.mxu0 0.0
    %959 = vmatpush2.msra.mxu0 0.0
    %960 = vmatprep.subr.mxu0 0.0
    %961 = vmatpush2.msra.mxu0 0.0
    %962 = vmatprep.mubr.f32.mxu0 0.0
    %963 = vmatmul.mubr.f32.gmra.mxu0 %v794
    %v964 = vpop.f32.mrf.mxu0
    %v965 = vadd.f32 %v879, %v964
    %v966 = vpop.f32.mrf.mxu0
    %967 = vdwg.mxu0
    %v968 = vtanh.pop %v965
    %v970 = vlaneseq
    %v971 = vshrl.u32 %v970, 7
    %v972 = vsub.s32 0, %v971
    %v973 = vrot.slane %v795, %v972
    %v975 = vmul.f32 %v968, %v973
    %vm976 = vcmask 517120
    %v977 = vsel %vm976, %v975, 0.0
    %978 = vadd.xlane.f32.xlu0 %v977
    %v979 = vpop.xlane.xlu0 %978
    %v980 = vld [vmem:[%s2] sm:$0xff]
    %v981 = vld [vmem:[%s2 + $0x8] sm:$0xff]
    %v982 = vld [vmem:[%s2 + $0x10] sm:$0xff]
    %v983 = vld [vmem:[%s2 + $0x18] sm:$0xff]
    %v984 = vld [vmem:[%s2 + $0x20] sm:$0xff]
    %v985 = vld [vmem:[%s2 + $0x28] sm:$0xff]
    %v986 = vld [vmem:[%s2 + $0x30] sm:$0xff]
    %v987 = vld [vmem:[%s2 + $0x38] sm:$0xff]
    %v988 = vld [vmem:[%s2 + $0x40] sm:$0xff]
    %v989 = vld [vmem:[%s2 + $0x48] sm:$0xff]
    %v990 = vld [vmem:[%s2 + $0x50] sm:$0xff]
    %v991 = vld [vmem:[%s2 + $0x58] sm:$0xff]
    %v992 = vld [vmem:[%s2 + $0x60] sm:$0xff]
    %v993 = vld [vmem:[%s2 + $0x68] sm:$0xff]
    %v994 = vld [vmem:[%s2 + $0x70] sm:$0xff]
    %v995 = vld [vmem:[%s2 + $0x78] sm:$0xff]
    %v996 = vld [vmem:[%s5] sm:$0xff]
    %v997 = vld [vmem:[%s5 + $0x8] sm:$0xff]
    %v998 = vld [vmem:[%s5 + $0x10] sm:$0xff]
    %v999 = vld [vmem:[%s5 + $0x18] sm:$0xff]
    %v1000 = vld [vmem:[%s5 + $0x20] sm:$0xff]
    %v1001 = vld [vmem:[%s5 + $0x28] sm:$0xff]
    %v1002 = vld [vmem:[%s5 + $0x30] sm:$0xff]
    %v1003 = vld [vmem:[%s5 + $0x38] sm:$0xff]
    %v1004 = vld [vmem:[%s5 + $0x40] sm:$0xff]
    %v1005 = vld [vmem:[%s5 + $0x48] sm:$0xff]
    %v1006 = vld [vmem:[%s5 + $0x50] sm:$0xff]
    %v1007 = vld [vmem:[%s5 + $0x58] sm:$0xff]
    %v1008 = vld [vmem:[%s5 + $0x60] sm:$0xff]
    %v1009 = vld [vmem:[%s5 + $0x68] sm:$0xff]
    %v1010 = vld [vmem:[%s5 + $0x70] sm:$0xff]
    %v1011 = vld [vmem:[%s5 + $0x78] sm:$0xff]
    %v1012 = vlaneseq
    %v1013 = vshrl.u32 %v1012, 7
    %v1014 = vadd.s32 %v1013, 8
    %v1015 = vadd.s32 %v1013, 16
    %v1016 = vadd.s32 %v1013, 24
    %v1017 = vadd.s32 %v1013, 32
    %v1018 = vadd.s32 %v1013, 40
    %v1019 = vadd.s32 %v1013, 48
    %v1020 = vadd.s32 %v1013, 56
    %v1021 = vadd.s32 %v1013, 64
    %v1022 = vadd.s32 %v1013, 72
    %v1023 = vadd.s32 %v1013, 80
    %v1024 = vadd.s32 %v1013, 88
    %v1025 = vadd.s32 %v1013, 96
    %v1026 = vadd.s32 %v1013, 104
    %v1027 = vadd.s32 %v1013, 112
    %v1028 = vadd.s32 %v1013, 120
    %v1029 = vshra.s32 %v1013, 6
    %v1030 = vshra.s32 %v1014, 6
    %v1031 = vshra.s32 %v1015, 6
    %v1032 = vshra.s32 %v1016, 6
    %v1033 = vshra.s32 %v1017, 6
    %v1034 = vshra.s32 %v1018, 6
    %v1035 = vshra.s32 %v1019, 6
    %v1036 = vshra.s32 %v1020, 6
    %v1037 = vshra.s32 %v1021, 6
    %v1038 = vshra.s32 %v1022, 6
    %v1039 = vshra.s32 %v1023, 6
    %v1040 = vshra.s32 %v1024, 6
    %v1041 = vshra.s32 %v1025, 6
    %v1042 = vshra.s32 %v1026, 6
    %v1043 = vshra.s32 %v1027, 6
    %v1044 = vshra.s32 %v1028, 6
    %v1045 = vlaneseq
    %v1046 = vand.u32 %v1045, 127
    %vm1047 = vcmp.eq.s32.totalorder %v1029, %v1046
    %vm1048 = vcmp.eq.s32.totalorder %v1030, %v1046
    %vm1049 = vcmp.eq.s32.totalorder %v1031, %v1046
    %vm1050 = vcmp.eq.s32.totalorder %v1032, %v1046
    %vm1051 = vcmp.eq.s32.totalorder %v1033, %v1046
    %vm1052 = vcmp.eq.s32.totalorder %v1034, %v1046
    %vm1053 = vcmp.eq.s32.totalorder %v1035, %v1046
    %vm1054 = vcmp.eq.s32.totalorder %v1036, %v1046
    %vm1055 = vcmp.eq.s32.totalorder %v1037, %v1046
    %vm1056 = vcmp.eq.s32.totalorder %v1038, %v1046
    %vm1057 = vcmp.eq.s32.totalorder %v1039, %v1046
    %vm1058 = vcmp.eq.s32.totalorder %v1040, %v1046
    %vm1059 = vcmp.eq.s32.totalorder %v1041, %v1046
    %vm1060 = vcmp.eq.s32.totalorder %v1042, %v1046
    %vm1061 = vcmp.eq.s32.totalorder %v1043, %v1046
    %vm1062 = vcmp.eq.s32.totalorder %v1044, %v1046
    %v1063 = vsel %vm1047, 1, 0
    %v1064 = vsel %vm1048, 1, 0
    %v1065 = vsel %vm1049, 1, 0
    %v1066 = vsel %vm1050, 1, 0
    %v1067 = vsel %vm1051, 1, 0
    %v1068 = vsel %vm1052, 1, 0
    %v1069 = vsel %vm1053, 1, 0
    %v1070 = vsel %vm1054, 1, 0
    %v1071 = vsel %vm1055, 1, 0
    %v1072 = vsel %vm1056, 1, 0
    %v1073 = vsel %vm1057, 1, 0
    %v1074 = vsel %vm1058, 1, 0
    %v1075 = vsel %vm1059, 1, 0
    %v1076 = vsel %vm1060, 1, 0
    %v1077 = vsel %vm1061, 1, 0
    %v1078 = vsel %vm1062, 1, 0
    %v1079 = vcvt.s32.f32 %v1063
    %v1080 = vcvt.s32.f32 %v1064
    %v1081 = vcvt.s32.f32 %v1065
    %v1082 = vcvt.s32.f32 %v1066
    %v1083 = vcvt.s32.f32 %v1067
    %v1084 = vcvt.s32.f32 %v1068
    %v1085 = vcvt.s32.f32 %v1069
    %v1086 = vcvt.s32.f32 %v1070
    %v1087 = vcvt.s32.f32 %v1071
    %v1088 = vcvt.s32.f32 %v1072
    %v1089 = vcvt.s32.f32 %v1073
    %v1090 = vcvt.s32.f32 %v1074
    %v1091 = vcvt.s32.f32 %v1075
    %v1092 = vcvt.s32.f32 %v1076
    %v1093 = vcvt.s32.f32 %v1077
    %v1094 = vcvt.s32.f32 %v1078
    %v1095 = vshra.s32 %v1046, 6
    %vm1096 = vcmp.eq.s32.totalorder %v1013, %v1095
    %v1097 = vsel %vm1096, 1, 0
    %v1098 = vcvt.s32.f32 %v1097
    %vm1099 = vcmask 15360
    %v1101 = vsel %vm1099, %v1079, 0
    %v1104 = vsel %vm1099, %v1080, 0
    %v1107 = vsel %vm1099, %v1081, 0
    %v1110 = vsel %vm1099, %v1082, 0
    %v1113 = vsel %vm1099, %v1083, 0
    %v1116 = vsel %vm1099, %v1084, 0
    %v1119 = vsel %vm1099, %v1085, 0
    %v1122 = vsel %vm1099, %v1086, 0
    %v1125 = vsel %vm1099, %v1087, 0
    %v1128 = vsel %vm1099, %v1088, 0
    %v1131 = vsel %vm1099, %v1089, 0
    %v1134 = vsel %vm1099, %v1090, 0
    %v1137 = vsel %vm1099, %v1091, 0
    %v1140 = vsel %vm1099, %v1092, 0
    %v1143 = vsel %vm1099, %v1093, 0
    %v1146 = vsel %vm1099, %v1094, 0
    %vm1148 = vcmask 1041408
    %v1150 = vsel %vm1148, %v879, 0
    %1152 = vmatprep.subr.mxu0 0.0
    %1153 = vmatpush1.msra.mxu0 0.0
    %1154 = vmatprep.subr.mxu0 0.0
    %1155 = vmatpush1.msra.mxu0 0.0
    %1156 = vmatprep.subr.mxu0 0.0
    %1157 = vmatpush1.msra.mxu0 0.0
    %1158 = vmatprep.subr.mxu0 0.0
    %1159 = vmatpush1.msra.mxu0 0.0
    %1160 = vmatprep.subr.mxu0 0.0
    %1161 = vmatpush1.msra.mxu0 0.0
    %1162 = vmatprep.subr.mxu0 0.0
    %1163 = vmatpush1.msra.mxu0 0.0
    %1164 = vmatprep.subr.mxu0 0.0
    %1165 = vmatpush1.msra.mxu0 0.0
    %1166 = vmatprep.subr.mxu0 0.0
    %1167 = vmatpush1.msra.mxu0 0.0
    %1168 = vmatprep.subr.mxu0 0.0
    %1169 = vmatpush1.msra.mxu0 0.0
    %1170 = vmatprep.subr.mxu0 0.0
    %1171 = vmatpush1.msra.mxu0 0.0
    %1172 = vmatprep.subr.mxu0 0.0
    %1173 = vmatpush1.msra.mxu0 0.0
    %1174 = vmatprep.subr.mxu0 0.0
    %1175 = vmatpush1.msra.mxu0 0.0
    %1176 = vmatprep.subr.mxu0 0.0
    %1177 = vmatpush1.msra.mxu0 0.0
    %1178 = vmatprep.subr.mxu0 0.0
    %1179 = vmatpush1.msra.mxu0 0.0
    %1180 = vmatprep.subr.mxu0 0.0
    %1181 = vmatpush1.msra.mxu0 0.0
    %1182 = vmatprep.subr.mxu0 0.0
    %1183 = vmatpush1.msra.mxu0 %v1150
    %1184 = vmatprep.subr.mxu0 0.0
    %1185 = vmatpush2.msra.mxu0 0.0
    %1186 = vmatprep.subr.mxu0 0.0
    %1187 = vmatpush2.msra.mxu0 0.0
    %1188 = vmatprep.subr.mxu0 0.0
    %1189 = vmatpush2.msra.mxu0 0.0
    %1190 = vmatprep.subr.mxu0 0.0
    %1191 = vmatpush2.msra.mxu0 0.0
    %1192 = vmatprep.subr.mxu0 0.0
    %1193 = vmatpush2.msra.mxu0 0.0
    %1194 = vmatprep.subr.mxu0 0.0
    %1195 = vmatpush2.msra.mxu0 0.0
    %1196 = vmatprep.subr.mxu0 0.0
    %1197 = vmatpush2.msra.mxu0 0.0
    %1198 = vmatprep.subr.mxu0 0.0
    %1199 = vmatpush2.msra.mxu0 0.0
    %1200 = vmatprep.subr.mxu0 0.0
    %1201 = vmatpush2.msra.mxu0 0.0
    %1202 = vmatprep.subr.mxu0 0.0
    %1203 = vmatpush2.msra.mxu0 0.0
    %1204 = vmatprep.subr.mxu0 0.0
    %1205 = vmatpush2.msra.mxu0 0.0
    %1206 = vmatprep.subr.mxu0 0.0
    %1207 = vmatpush2.msra.mxu0 0.0
    %1208 = vmatprep.subr.mxu0 0.0
    %1209 = vmatpush2.msra.mxu0 0.0
    %1210 = vmatprep.subr.mxu0 0.0
    %1211 = vmatpush2.msra.mxu0 0.0
    %1212 = vmatprep.subr.mxu0 0.0
    %1213 = vmatpush2.msra.mxu0 0.0
    %1214 = vmatprep.subr.mxu0 0.0
    %1215 = vmatpush2.msra.mxu0 0.0
    %1216 = vmatprep.mubr.f32.mxu0 0.0
    %1217 = vmatmul.mubr.f32.gmra.mxu0 %v1101
    %v1218 = vpop.f32.mrf.mxu0
    %v1219 = vadd.f32 0.0, %v1218
    %v1220 = vpop.f32.mrf.mxu0
    %1221 = vmatprep.mubr.f32.mxu0 0.0
    %1222 = vmatmul.mubr.f32.gmra.mxu0 %v1104
    %v1223 = vpop.f32.mrf.mxu0
    %v1224 = vadd.f32 0.0, %v1223
    %v1225 = vpop.f32.mrf.mxu0
    %1226 = vmatprep.mubr.f32.mxu0 0.0
    %1227 = vmatmul.mubr.f32.gmra.mxu0 %v1107
    %v1228 = vpop.f32.mrf.mxu0
    %v1229 = vadd.f32 0.0, %v1228
    %v1230 = vpop.f32.mrf.mxu0
    %1231 = vmatprep.mubr.f32.mxu0 0.0
    %1232 = vmatmul.mubr.f32.gmra.mxu0 %v1110
    %v1233 = vpop.f32.mrf.mxu0
    %v1234 = vadd.f32 0.0, %v1233
    %v1235 = vpop.f32.mrf.mxu0
    %1236 = vmatprep.mubr.f32.mxu0 0.0
    %1237 = vmatmul.mubr.f32.gmra.mxu0 %v1113
    %v1238 = vpop.f32.mrf.mxu0
    %v1239 = vadd.f32 0.0, %v1238
    %v1240 = vpop.f32.mrf.mxu0
    %1241 = vmatprep.mubr.f32.mxu0 0.0
    %1242 = vmatmul.mubr.f32.gmra.mxu0 %v1116
    %v1243 = vpop.f32.mrf.mxu0
    %v1244 = vadd.f32 0.0, %v1243
    %v1245 = vpop.f32.mrf.mxu0
    %1246 = vmatprep.mubr.f32.mxu0 0.0
    %1247 = vmatmul.mubr.f32.gmra.mxu0 %v1119
    %v1248 = vpop.f32.mrf.mxu0
    %v1249 = vadd.f32 0.0, %v1248
    %v1250 = vpop.f32.mrf.mxu0
    %1251 = vmatprep.mubr.f32.mxu0 0.0
    %1252 = vmatmul.mubr.f32.gmra.mxu0 %v1122
    %v1253 = vpop.f32.mrf.mxu0
    %v1254 = vadd.f32 0.0, %v1253
    %v1255 = vpop.f32.mrf.mxu0
    %1256 = vmatprep.mubr.f32.mxu0 0.0
    %1257 = vmatmul.mubr.f32.gmra.mxu0 %v1125
    %v1258 = vpop.f32.mrf.mxu0
    %v1259 = vadd.f32 0.0, %v1258
    %v1260 = vpop.f32.mrf.mxu0
    %1261 = vmatprep.mubr.f32.mxu0 0.0
    %1262 = vmatmul.mubr.f32.gmra.mxu0 %v1128
    %v1263 = vpop.f32.mrf.mxu0
    %v1264 = vadd.f32 0.0, %v1263
    %v1265 = vpop.f32.mrf.mxu0
    %1266 = vmatprep.mubr.f32.mxu0 0.0
    %1267 = vmatmul.mubr.f32.gmra.mxu0 %v1131
    %v1268 = vpop.f32.mrf.mxu0
    %v1269 = vadd.f32 0.0, %v1268
    %v1270 = vpop.f32.mrf.mxu0
    %1271 = vmatprep.mubr.f32.mxu0 0.0
    %1272 = vmatmul.mubr.f32.gmra.mxu0 %v1134
    %v1273 = vpop.f32.mrf.mxu0
    %v1274 = vadd.f32 0.0, %v1273
    %v1275 = vpop.f32.mrf.mxu0
    %1276 = vmatprep.mubr.f32.mxu0 0.0
    %1277 = vmatmul.mubr.f32.gmra.mxu0 %v1137
    %v1278 = vpop.f32.mrf.mxu0
    %v1279 = vadd.f32 0.0, %v1278
    %v1280 = vpop.f32.mrf.mxu0
    %1281 = vmatprep.mubr.f32.mxu0 0.0
    %1282 = vmatmul.mubr.f32.gmra.mxu0 %v1140
    %v1283 = vpop.f32.mrf.mxu0
    %v1284 = vadd.f32 0.0, %v1283
    %v1285 = vpop.f32.mrf.mxu0
    %1286 = vmatprep.mubr.f32.mxu0 0.0
    %1287 = vmatmul.mubr.f32.gmra.mxu0 %v1143
    %v1288 = vpop.f32.mrf.mxu0
    %v1289 = vadd.f32 0.0, %v1288
    %v1290 = vpop.f32.mrf.mxu0
    %1291 = vmatprep.mubr.f32.mxu0 0.0
    %1292 = vmatmul.mubr.f32.gmra.mxu0 %v1146
    %v1293 = vpop.f32.mrf.mxu0
    %v1294 = vadd.f32 0.0, %v1293
    %v1295 = vpop.f32.mrf.mxu0
    %1296 = vdwg.mxu0
    %v1297 = vand.u32 %v1013, 63
    %v1298 = vand.u32 %v1014, 63
    %v1299 = vand.u32 %v1015, 63
    %v1300 = vand.u32 %v1016, 63
    %v1301 = vand.u32 %v1017, 63
    %v1302 = vand.u32 %v1018, 63
    %v1303 = vand.u32 %v1019, 63
    %v1304 = vand.u32 %v1020, 63
    %v1305 = vand.u32 %v1021, 63
    %v1306 = vand.u32 %v1022, 63
    %v1307 = vand.u32 %v1023, 63
    %v1308 = vand.u32 %v1024, 63
    %v1309 = vand.u32 %v1025, 63
    %v1310 = vand.u32 %v1026, 63
    %v1311 = vand.u32 %v1027, 63
    %v1312 = vand.u32 %v1028, 63
    %vm1313 = vcmp.eq.s32.totalorder %v1297, %v1046
    %vm1314 = vcmp.eq.s32.totalorder %v1298, %v1046
    %vm1315 = vcmp.eq.s32.totalorder %v1299, %v1046
    %vm1316 = vcmp.eq.s32.totalorder %v1300, %v1046
    %vm1317 = vcmp.eq.s32.totalorder %v1301, %v1046
    %vm1318 = vcmp.eq.s32.totalorder %v1302, %v1046
    %vm1319 = vcmp.eq.s32.totalorder %v1303, %v1046
    %vm1320 = vcmp.eq.s32.totalorder %v1304, %v1046
    %vm1321 = vcmp.eq.s32.totalorder %v1305, %v1046
    %vm1322 = vcmp.eq.s32.totalorder %v1306, %v1046
    %vm1323 = vcmp.eq.s32.totalorder %v1307, %v1046
    %vm1324 = vcmp.eq.s32.totalorder %v1308, %v1046
    %vm1325 = vcmp.eq.s32.totalorder %v1309, %v1046
    %vm1326 = vcmp.eq.s32.totalorder %v1310, %v1046
    %vm1327 = vcmp.eq.s32.totalorder %v1311, %v1046
    %vm1328 = vcmp.eq.s32.totalorder %v1312, %v1046
    %v1329 = vsel %vm1313, 1, 0
    %v1330 = vsel %vm1314, 1, 0
    %v1331 = vsel %vm1315, 1, 0
    %v1332 = vsel %vm1316, 1, 0
    %v1333 = vsel %vm1317, 1, 0
    %v1334 = vsel %vm1318, 1, 0
    %v1335 = vsel %vm1319, 1, 0
    %v1336 = vsel %vm1320, 1, 0
    %v1337 = vsel %vm1321, 1, 0
    %v1338 = vsel %vm1322, 1, 0
    %v1339 = vsel %vm1323, 1, 0
    %v1340 = vsel %vm1324, 1, 0
    %v1341 = vsel %vm1325, 1, 0
    %v1342 = vsel %vm1326, 1, 0
    %v1343 = vsel %vm1327, 1, 0
    %v1344 = vsel %vm1328, 1, 0
    %v1345 = vcvt.s32.f32 %v1329
    %v1346 = vcvt.s32.f32 %v1330
    %v1347 = vcvt.s32.f32 %v1331
    %v1348 = vcvt.s32.f32 %v1332
    %v1349 = vcvt.s32.f32 %v1333
    %v1350 = vcvt.s32.f32 %v1334
    %v1351 = vcvt.s32.f32 %v1335
    %v1352 = vcvt.s32.f32 %v1336
    %v1353 = vcvt.s32.f32 %v1337
    %v1354 = vcvt.s32.f32 %v1338
    %v1355 = vcvt.s32.f32 %v1339
    %v1356 = vcvt.s32.f32 %v1340
    %v1357 = vcvt.s32.f32 %v1341
    %v1358 = vcvt.s32.f32 %v1342
    %v1359 = vcvt.s32.f32 %v1343
    %v1360 = vcvt.s32.f32 %v1344
    %v1361 = vmul.f32 %v1219, %v1345
    %v1362 = vmul.f32 %v1224, %v1346
    %v1363 = vmul.f32 %v1229, %v1347
    %v1364 = vmul.f32 %v1234, %v1348
    %v1365 = vmul.f32 %v1239, %v1349
    %v1366 = vmul.f32 %v1244, %v1350
    %v1367 = vmul.f32 %v1249, %v1351
    %v1368 = vmul.f32 %v1254, %v1352
    %v1369 = vmul.f32 %v1259, %v1353
    %v1370 = vmul.f32 %v1264, %v1354
    %v1371 = vmul.f32 %v1269, %v1355
    %v1372 = vmul.f32 %v1274, %v1356
    %v1373 = vmul.f32 %v1279, %v1357
    %v1374 = vmul.f32 %v1284, %v1358
    %v1375 = vmul.f32 %v1289, %v1359
    %v1376 = vmul.f32 %v1294, %v1360
    %vm1377 = vcmask 523264
    %v1378 = vsel %vm1377, %v1361, 0.0
    %1379 = vadd.xlane.f32.xlu0 %v1378
    %v1380 = vpop.xlane.xlu0 %1379
    %v1381 = vsel %vm1377, %v1362, 0.0
    %1382 = vadd.xlane.f32.xlu0 %v1381
    %v1383 = vpop.xlane.xlu0 %1382
    %v1384 = vsel %vm1377, %v1363, 0.0
    %1385 = vadd.xlane.f32.xlu0 %v1384
    %v1386 = vpop.xlane.xlu0 %1385
    %v1387 = vsel %vm1377, %v1364, 0.0
    %1388 = vadd.xlane.f32.xlu0 %v1387
    %v1389 = vpop.xlane.xlu0 %1388
    %v1390 = vsel %vm1377, %v1365, 0.0
    %1391 = vadd.xlane.f32.xlu0 %v1390
    %v1392 = vpop.xlane.xlu0 %1391
    %v1393 = vsel %vm1377, %v1366, 0.0
    %1394 = vadd.xlane.f32.xlu0 %v1393
    %v1395 = vpop.xlane.xlu0 %1394
    %v1396 = vsel %vm1377, %v1367, 0.0
    %1397 = vadd.xlane.f32.xlu0 %v1396
    %v1398 = vpop.xlane.xlu0 %1397
    %v1399 = vsel %vm1377, %v1368, 0.0
    %1400 = vadd.xlane.f32.xlu0 %v1399
    %v1401 = vpop.xlane.xlu0 %1400
    %v1402 = vsel %vm1377, %v1369, 0.0
    %1403 = vadd.xlane.f32.xlu0 %v1402
    %v1404 = vpop.xlane.xlu0 %1403
    %v1405 = vsel %vm1377, %v1370, 0.0
    %1406 = vadd.xlane.f32.xlu0 %v1405
    %v1407 = vpop.xlane.xlu0 %1406
    %v1408 = vsel %vm1377, %v1371, 0.0
    %1409 = vadd.xlane.f32.xlu0 %v1408
    %v1410 = vpop.xlane.xlu0 %1409
    %v1411 = vsel %vm1377, %v1372, 0.0
    %1412 = vadd.xlane.f32.xlu0 %v1411
    %v1413 = vpop.xlane.xlu0 %1412
    %v1414 = vsel %vm1377, %v1373, 0.0
    %1415 = vadd.xlane.f32.xlu0 %v1414
    %v1416 = vpop.xlane.xlu0 %1415
    %v1417 = vsel %vm1377, %v1374, 0.0
    %1418 = vadd.xlane.f32.xlu0 %v1417
    %v1419 = vpop.xlane.xlu0 %1418
    %v1420 = vsel %vm1377, %v1375, 0.0
    %1421 = vadd.xlane.f32.xlu0 %v1420
    %v1422 = vpop.xlane.xlu0 %1421
    %v1423 = vsel %vm1377, %v1376, 0.0
    %1424 = vadd.xlane.f32.xlu0 %v1423
    %v1425 = vpop.xlane.xlu0 %1424
    %1426 = vmatprep.subr.mxu0 0.0
    %1427 = vmatpush1.msra.mxu0 %v1011
    %1428 = vmatprep.subr.mxu0 0.0
    %1429 = vmatpush1.msra.mxu0 %v1010
    %1430 = vmatprep.subr.mxu0 0.0
    %1431 = vmatpush1.msra.mxu0 %v1009
    %1432 = vmatprep.subr.mxu0 0.0
    %1433 = vmatpush1.msra.mxu0 %v1008
    %1434 = vmatprep.subr.mxu0 0.0
    %1435 = vmatpush1.msra.mxu0 %v1007
    %1436 = vmatprep.subr.mxu0 0.0
    %1437 = vmatpush1.msra.mxu0 %v1006
    %1438 = vmatprep.subr.mxu0 0.0
    %1439 = vmatpush1.msra.mxu0 %v1005
    %1440 = vmatprep.subr.mxu0 0.0
    %1441 = vmatpush1.msra.mxu0 %v1004
    %1442 = vmatprep.subr.mxu0 0.0
    %1443 = vmatpush1.msra.mxu0 %v1003
    %1444 = vmatprep.subr.mxu0 0.0
    %1445 = vmatpush1.msra.mxu0 %v1002
    %1446 = vmatprep.subr.mxu0 0.0
    %1447 = vmatpush1.msra.mxu0 %v1001
    %1448 = vmatprep.subr.mxu0 0.0
    %1449 = vmatpush1.msra.mxu0 %v1000
    %1450 = vmatprep.subr.mxu0 0.0
    %1451 = vmatpush1.msra.mxu0 %v999
    %1452 = vmatprep.subr.mxu0 0.0
    %1453 = vmatpush1.msra.mxu0 %v998
    %1454 = vmatprep.subr.mxu0 0.0
    %1455 = vmatpush1.msra.mxu0 %v997
    %1456 = vmatprep.subr.mxu0 0.0
    %1457 = vmatpush1.msra.mxu0 %v996
    %1458 = vmatprep.subr.mxu0 0.0
    %1459 = vmatpush2.msra.mxu0 0.0
    %1460 = vmatprep.subr.mxu0 0.0
    %1461 = vmatpush2.msra.mxu0 0.0
    %1462 = vmatprep.subr.mxu0 0.0
    %1463 = vmatpush2.msra.mxu0 0.0
    %1464 = vmatprep.subr.mxu0 0.0
    %1465 = vmatpush2.msra.mxu0 0.0
    %1466 = vmatprep.subr.mxu0 0.0
    %1467 = vmatpush2.msra.mxu0 0.0
    %1468 = vmatprep.subr.mxu0 0.0
    %1469 = vmatpush2.msra.mxu0 0.0
    %1470 = vmatprep.subr.mxu0 0.0
    %1471 = vmatpush2.msra.mxu0 0.0
    %1472 = vmatprep.subr.mxu0 0.0
    %1473 = vmatpush2.msra.mxu0 0.0
    %1474 = vmatprep.subr.mxu0 0.0
    %1475 = vmatpush2.msra.mxu0 0.0
    %1476 = vmatprep.subr.mxu0 0.0
    %1477 = vmatpush2.msra.mxu0 0.0
    %1478 = vmatprep.subr.mxu0 0.0
    %1479 = vmatpush2.msra.mxu0 0.0
    %1480 = vmatprep.subr.mxu0 0.0
    %1481 = vmatpush2.msra.mxu0 0.0
    %1482 = vmatprep.subr.mxu0 0.0
    %1483 = vmatpush2.msra.mxu0 0.0
    %1484 = vmatprep.subr.mxu0 0.0
    %1485 = vmatpush2.msra.mxu0 0.0
    %1486 = vmatprep.subr.mxu0 0.0
    %1487 = vmatpush2.msra.mxu0 0.0
    %1488 = vmatprep.subr.mxu0 0.0
    %1489 = vmatpush2.msra.mxu0 0.0
    %1490 = vmatprep.mubr.f32.mxu0 0.0
    %1491 = vmatmul.mubr.f32.gmra.mxu0 %v980
    %v1492 = vpop.f32.mrf.mxu0
    %v1493 = vadd.f32 %v1380, %v1492
    %v1494 = vpop.f32.mrf.mxu0
    %1495 = vmatprep.mubr.f32.mxu0 0.0
    %1496 = vmatmul.mubr.f32.gmra.mxu0 %v981
    %v1497 = vpop.f32.mrf.mxu0
    %v1498 = vadd.f32 %v1383, %v1497
    %v1499 = vpop.f32.mrf.mxu0
    %1500 = vmatprep.mubr.f32.mxu0 0.0
    %1501 = vmatmul.mubr.f32.gmra.mxu0 %v982
    %v1502 = vpop.f32.mrf.mxu0
    %v1503 = vadd.f32 %v1386, %v1502
    %v1504 = vpop.f32.mrf.mxu0
    %1505 = vmatprep.mubr.f32.mxu0 0.0
    %1506 = vmatmul.mubr.f32.gmra.mxu0 %v983
    %v1507 = vpop.f32.mrf.mxu0
    %v1508 = vadd.f32 %v1389, %v1507
    %v1509 = vpop.f32.mrf.mxu0
    %1510 = vmatprep.mubr.f32.mxu0 0.0
    %1511 = vmatmul.mubr.f32.gmra.mxu0 %v984
    %v1512 = vpop.f32.mrf.mxu0
    %v1513 = vadd.f32 %v1392, %v1512
    %v1514 = vpop.f32.mrf.mxu0
    %1515 = vmatprep.mubr.f32.mxu0 0.0
    %1516 = vmatmul.mubr.f32.gmra.mxu0 %v985
    %v1517 = vpop.f32.mrf.mxu0
    %v1518 = vadd.f32 %v1395, %v1517
    %v1519 = vpop.f32.mrf.mxu0
    %1520 = vmatprep.mubr.f32.mxu0 0.0
    %1521 = vmatmul.mubr.f32.gmra.mxu0 %v986
    %v1522 = vpop.f32.mrf.mxu0
    %v1523 = vadd.f32 %v1398, %v1522
    %v1524 = vpop.f32.mrf.mxu0
    %1525 = vmatprep.mubr.f32.mxu0 0.0
    %1526 = vmatmul.mubr.f32.gmra.mxu0 %v987
    %v1527 = vpop.f32.mrf.mxu0
    %v1528 = vadd.f32 %v1401, %v1527
    %v1529 = vpop.f32.mrf.mxu0
    %1530 = vmatprep.mubr.f32.mxu0 0.0
    %1531 = vmatmul.mubr.f32.gmra.mxu0 %v988
    %v1532 = vpop.f32.mrf.mxu0
    %v1533 = vadd.f32 %v1404, %v1532
    %v1534 = vpop.f32.mrf.mxu0
    %1535 = vmatprep.mubr.f32.mxu0 0.0
    %1536 = vmatmul.mubr.f32.gmra.mxu0 %v989
    %v1537 = vpop.f32.mrf.mxu0
    %v1538 = vadd.f32 %v1407, %v1537
    %v1539 = vpop.f32.mrf.mxu0
    %1540 = vmatprep.mubr.f32.mxu0 0.0
    %1541 = vmatmul.mubr.f32.gmra.mxu0 %v990
    %v1542 = vpop.f32.mrf.mxu0
    %v1543 = vadd.f32 %v1410, %v1542
    %v1544 = vpop.f32.mrf.mxu0
    %1545 = vmatprep.mubr.f32.mxu0 0.0
    %1546 = vmatmul.mubr.f32.gmra.mxu0 %v991
    %v1547 = vpop.f32.mrf.mxu0
    %v1548 = vadd.f32 %v1413, %v1547
    %v1549 = vpop.f32.mrf.mxu0
    %1550 = vmatprep.mubr.f32.mxu0 0.0
    %1551 = vmatmul.mubr.f32.gmra.mxu0 %v992
    %v1552 = vpop.f32.mrf.mxu0
    %v1553 = vadd.f32 %v1416, %v1552
    %v1554 = vpop.f32.mrf.mxu0
    %1555 = vmatprep.mubr.f32.mxu0 0.0
    %1556 = vmatmul.mubr.f32.gmra.mxu0 %v993
    %v1557 = vpop.f32.mrf.mxu0
    %v1558 = vadd.f32 %v1419, %v1557
    %v1559 = vpop.f32.mrf.mxu0
    %1560 = vmatprep.mubr.f32.mxu0 0.0
    %1561 = vmatmul.mubr.f32.gmra.mxu0 %v994
    %v1562 = vpop.f32.mrf.mxu0
    %v1563 = vadd.f32 %v1422, %v1562
    %v1564 = vpop.f32.mrf.mxu0
    %1565 = vmatprep.mubr.f32.mxu0 0.0
    %1566 = vmatmul.mubr.f32.gmra.mxu0 %v995
    %v1567 = vpop.f32.mrf.mxu0
    %v1568 = vadd.f32 %v1425, %v1567
    %v1569 = vpop.f32.mrf.mxu0
    %1570 = vdwg.mxu0
    %v1571 = vtanh.pop %v1493
    %v1572 = vtanh.pop %v1498
    %v1573 = vtanh.pop %v1503
    %v1574 = vtanh.pop %v1508
    %v1575 = vtanh.pop %v1513
    %v1576 = vtanh.pop %v1518
    %v1577 = vtanh.pop %v1523
    %v1578 = vtanh.pop %v1528
    %v1579 = vtanh.pop %v1533
    %v1580 = vtanh.pop %v1538
    %v1581 = vtanh.pop %v1543
    %v1582 = vtanh.pop %v1548
    %v1583 = vtanh.pop %v1553
    %v1584 = vtanh.pop %v1558
    %v1585 = vtanh.pop %v1563
    %v1586 = vtanh.pop %v1568
    %v1587 = vmul.f32 %v1571, %v973
    %v1588 = vmul.f32 %v1572, %v973
    %v1589 = vmul.f32 %v1573, %v973
    %v1590 = vmul.f32 %v1574, %v973
    %v1591 = vmul.f32 %v1575, %v973
    %v1592 = vmul.f32 %v1576, %v973
    %v1593 = vmul.f32 %v1577, %v973
    %v1594 = vmul.f32 %v1578, %v973
    %v1595 = vmul.f32 %v1579, %v973
    %v1596 = vmul.f32 %v1580, %v973
    %v1597 = vmul.f32 %v1581, %v973
    %v1598 = vmul.f32 %v1582, %v973
    %v1599 = vmul.f32 %v1583, %v973
    %v1600 = vmul.f32 %v1584, %v973
    %v1601 = vmul.f32 %v1585, %v973
    %v1602 = vmul.f32 %v1586, %v973
    %v1603 = vsel %vm1377, %v1587, 0.0
    %1604 = vadd.xlane.f32.xlu0 %v1603
    %v1605 = vpop.xlane.xlu0 %1604
    %v1606 = vsel %vm1377, %v1588, 0.0
    %1607 = vadd.xlane.f32.xlu0 %v1606
    %v1608 = vpop.xlane.xlu0 %1607
    %v1609 = vsel %vm1377, %v1589, 0.0
    %1610 = vadd.xlane.f32.xlu0 %v1609
    %v1611 = vpop.xlane.xlu0 %1610
    %v1612 = vsel %vm1377, %v1590, 0.0
    %1613 = vadd.xlane.f32.xlu0 %v1612
    %v1614 = vpop.xlane.xlu0 %1613
    %v1615 = vsel %vm1377, %v1591, 0.0
    %1616 = vadd.xlane.f32.xlu0 %v1615
    %v1617 = vpop.xlane.xlu0 %1616
    %v1618 = vsel %vm1377, %v1592, 0.0
    %1619 = vadd.xlane.f32.xlu0 %v1618
    %v1620 = vpop.xlane.xlu0 %1619
    %v1621 = vsel %vm1377, %v1593, 0.0
    %1622 = vadd.xlane.f32.xlu0 %v1621
    %v1623 = vpop.xlane.xlu0 %1622
    %v1624 = vsel %vm1377, %v1594, 0.0
    %1625 = vadd.xlane.f32.xlu0 %v1624
    %v1626 = vpop.xlane.xlu0 %1625
    %v1627 = vsel %vm1377, %v1595, 0.0
    %1628 = vadd.xlane.f32.xlu0 %v1627
    %v1629 = vpop.xlane.xlu0 %1628
    %v1630 = vsel %vm1377, %v1596, 0.0
    %1631 = vadd.xlane.f32.xlu0 %v1630
    %v1632 = vpop.xlane.xlu0 %1631
    %v1633 = vsel %vm1377, %v1597, 0.0
    %1634 = vadd.xlane.f32.xlu0 %v1633
    %v1635 = vpop.xlane.xlu0 %1634
    %v1636 = vsel %vm1377, %v1598, 0.0
    %1637 = vadd.xlane.f32.xlu0 %v1636
    %v1638 = vpop.xlane.xlu0 %1637
    %v1639 = vsel %vm1377, %v1599, 0.0
    %1640 = vadd.xlane.f32.xlu0 %v1639
    %v1641 = vpop.xlane.xlu0 %1640
    %v1642 = vsel %vm1377, %v1600, 0.0
    %1643 = vadd.xlane.f32.xlu0 %v1642
    %v1644 = vpop.xlane.xlu0 %1643
    %v1645 = vsel %vm1377, %v1601, 0.0
    %1646 = vadd.xlane.f32.xlu0 %v1645
    %v1647 = vpop.xlane.xlu0 %1646
    %v1648 = vsel %vm1377, %v1602, 0.0
    %1649 = vadd.xlane.f32.xlu0 %v1648
    %v1650 = vpop.xlane.xlu0 %1649
    %vm1651 = vcmp.lt.s32.totalorder %v1297, 49
    %vm1652 = vcmp.lt.s32.totalorder %v1298, 49
    %vm1653 = vcmp.lt.s32.totalorder %v1299, 49
    %vm1654 = vcmp.lt.s32.totalorder %v1300, 49
    %vm1655 = vcmp.lt.s32.totalorder %v1301, 49
    %vm1656 = vcmp.lt.s32.totalorder %v1302, 49
    %vm1657 = vcmp.lt.s32.totalorder %v1303, 49
    %vm1658 = vcmp.lt.s32.totalorder %v1304, 49
    %vm1659 = vcmp.lt.s32.totalorder %v1305, 49
    %vm1660 = vcmp.lt.s32.totalorder %v1306, 49
    %vm1661 = vcmp.lt.s32.totalorder %v1307, 49
    %vm1662 = vcmp.lt.s32.totalorder %v1308, 49
    %vm1663 = vcmp.lt.s32.totalorder %v1309, 49
    %vm1664 = vcmp.lt.s32.totalorder %v1310, 49
    %vm1665 = vcmp.lt.s32.totalorder %v1311, 49
    %vm1666 = vcmp.lt.s32.totalorder %v1312, 49
    %v1667 = vsel %vm1651, %v1605, -1e+30
    %v1668 = vsel %vm1652, %v1608, -1e+30
    %v1669 = vsel %vm1653, %v1611, -1e+30
    %v1670 = vsel %vm1654, %v1614, -1e+30
    %v1671 = vsel %vm1655, %v1617, -1e+30
    %v1672 = vsel %vm1656, %v1620, -1e+30
    %v1673 = vsel %vm1657, %v1623, -1e+30
    %v1674 = vsel %vm1658, %v1626, -1e+30
    %v1675 = vsel %vm1659, %v1629, -1e+30
    %v1676 = vsel %vm1660, %v1632, -1e+30
    %v1677 = vsel %vm1661, %v1635, -1e+30
    %v1678 = vsel %vm1662, %v1638, -1e+30
    %v1679 = vsel %vm1663, %v1641, -1e+30
    %v1680 = vsel %vm1664, %v1644, -1e+30
    %v1681 = vsel %vm1665, %v1647, -1e+30
    %v1682 = vsel %vm1666, %v1650, -1e+30
    %v1683 = vmax.f32 %v1667, %v1671
    %v1684 = vmax.f32 %v1668, %v1672
    %v1685 = vmax.f32 %v1669, %v1673
    %v1686 = vmax.f32 %v1670, %v1674
    %v1687 = vmax.f32 %v1683, %v1675
    %v1688 = vmax.f32 %v1684, %v1676
    %v1689 = vmax.f32 %v1685, %v1677
    %v1690 = vmax.f32 %v1686, %v1678
    %v1691 = vmax.f32 %v1687, %v1679
    %v1692 = vmax.f32 %v1688, %v1680
    %v1693 = vmax.f32 %v1689, %v1681
    %v1694 = vmax.f32 %v1690, %v1682
    %v1695 = vmax.f32 %v1691, %v1692
    %v1696 = vmax.f32 %v1693, %v1694
    %v1697 = vmax.f32 %v1695, %v1696
    %v1698 = vrot.slane %v1697, 4
    %v1699 = vmax.f32 %v1697, %v1698
    %v1700 = vrot.slane %v1699, 2
    %v1701 = vmax.f32 %v1699, %v1700
    %v1702 = vrot.slane %v1701, 1
    %v1703 = vmax.f32 %v1701, %v1702
    %v1704 = vsel %vm1148, %v979, -inf
    %v1705 = vrot.slane %v1704, 4
    %v1706 = vmax.f32 %v1704, %v1705
    %v1707 = vrot.slane %v1706, 2
    %v1708 = vmax.f32 %v1706, %v1707
    %v1709 = vrot.slane %v1708, 1
    %v1710 = vmax.f32 %v1708, %v1709
    %v1711 = vmax.f32 %v1703, %v1710
    %v1712 = vsub.f32 %v1667, %v1711
    %v1713 = vsub.f32 %v1668, %v1711
    %v1714 = vsub.f32 %v1669, %v1711
    %v1715 = vsub.f32 %v1670, %v1711
    %v1716 = vsub.f32 %v1671, %v1711
    %v1717 = vsub.f32 %v1672, %v1711
    %v1718 = vsub.f32 %v1673, %v1711
    %v1719 = vsub.f32 %v1674, %v1711
    %v1720 = vsub.f32 %v1675, %v1711
    %v1721 = vsub.f32 %v1676, %v1711
    %v1722 = vsub.f32 %v1677, %v1711
    %v1723 = vsub.f32 %v1678, %v1711
    %v1724 = vsub.f32 %v1679, %v1711
    %v1725 = vsub.f32 %v1680, %v1711
    %v1726 = vsub.f32 %v1681, %v1711
    %v1727 = vsub.f32 %v1682, %v1711
    %v1728 = vmul.f32 %v1712, 1.442695
    %v1729 = vpow.pop %v1728
    %v1730 = vmul.f32 %v1713, 1.442695
    %v1731 = vpow.pop %v1730
    %v1732 = vmul.f32 %v1714, 1.442695
    %v1733 = vpow.pop %v1732
    %v1734 = vmul.f32 %v1715, 1.442695
    %v1735 = vpow.pop %v1734
    %v1736 = vmul.f32 %v1716, 1.442695
    %v1737 = vpow.pop %v1736
    %v1738 = vmul.f32 %v1717, 1.442695
    %v1739 = vpow.pop %v1738
    %v1740 = vmul.f32 %v1718, 1.442695
    %v1741 = vpow.pop %v1740
    %v1742 = vmul.f32 %v1719, 1.442695
    %v1743 = vpow.pop %v1742
    %v1744 = vmul.f32 %v1720, 1.442695
    %v1745 = vpow.pop %v1744
    %v1746 = vmul.f32 %v1721, 1.442695
    %v1747 = vpow.pop %v1746
    %v1748 = vmul.f32 %v1722, 1.442695
    %v1749 = vpow.pop %v1748
    %v1750 = vmul.f32 %v1723, 1.442695
    %v1751 = vpow.pop %v1750
    %v1752 = vmul.f32 %v1724, 1.442695
    %v1753 = vpow.pop %v1752
    %v1754 = vmul.f32 %v1725, 1.442695
    %v1755 = vpow.pop %v1754
    %v1756 = vmul.f32 %v1726, 1.442695
    %v1757 = vpow.pop %v1756
    %v1758 = vmul.f32 %v1727, 1.442695
    %v1759 = vpow.pop %v1758
    %v1760 = vsel %vm1651, 1, 0
    %v1761 = vsel %vm1652, 1, 0
    %v1762 = vsel %vm1653, 1, 0
    %v1763 = vsel %vm1654, 1, 0
    %v1764 = vsel %vm1655, 1, 0
    %v1765 = vsel %vm1656, 1, 0
    %v1766 = vsel %vm1657, 1, 0
    %v1767 = vsel %vm1658, 1, 0
    %v1768 = vsel %vm1659, 1, 0
    %v1769 = vsel %vm1660, 1, 0
    %v1770 = vsel %vm1661, 1, 0
    %v1771 = vsel %vm1662, 1, 0
    %v1772 = vsel %vm1663, 1, 0
    %v1773 = vsel %vm1664, 1, 0
    %v1774 = vsel %vm1665, 1, 0
    %v1775 = vsel %vm1666, 1, 0
    %v1776 = vcvt.s32.f32 %v1760
    %v1777 = vcvt.s32.f32 %v1761
    %v1778 = vcvt.s32.f32 %v1762
    %v1779 = vcvt.s32.f32 %v1763
    %v1780 = vcvt.s32.f32 %v1764
    %v1781 = vcvt.s32.f32 %v1765
    %v1782 = vcvt.s32.f32 %v1766
    %v1783 = vcvt.s32.f32 %v1767
    %v1784 = vcvt.s32.f32 %v1768
    %v1785 = vcvt.s32.f32 %v1769
    %v1786 = vcvt.s32.f32 %v1770
    %v1787 = vcvt.s32.f32 %v1771
    %v1788 = vcvt.s32.f32 %v1772
    %v1789 = vcvt.s32.f32 %v1773
    %v1790 = vcvt.s32.f32 %v1774
    %v1791 = vcvt.s32.f32 %v1775
    %v1792 = vmul.f32 %v1729, %v1776
    %v1793 = vmul.f32 %v1731, %v1777
    %v1794 = vmul.f32 %v1733, %v1778
    %v1795 = vmul.f32 %v1735, %v1779
    %v1796 = vmul.f32 %v1737, %v1780
    %v1797 = vmul.f32 %v1739, %v1781
    %v1798 = vmul.f32 %v1741, %v1782
    %v1799 = vmul.f32 %v1743, %v1783
    %v1800 = vmul.f32 %v1745, %v1784
    %v1801 = vmul.f32 %v1747, %v1785
    %v1802 = vmul.f32 %v1749, %v1786
    %v1803 = vmul.f32 %v1751, %v1787
    %v1804 = vmul.f32 %v1753, %v1788
    %v1805 = vmul.f32 %v1755, %v1789
    %v1806 = vmul.f32 %v1757, %v1790
    %v1807 = vmul.f32 %v1759, %v1791
    %v1808 = vsub.f32 %v979, %v1711
    %v1809 = vmul.f32 %v1808, 1.442695
    %v1810 = vpow.pop %v1809
    %1811 = vmatprep.subr.mxu0 0.0
    %1812 = vmatpush1.msra.mxu0 %v1807
    %1813 = vmatprep.subr.mxu0 0.0
    %1814 = vmatpush1.msra.mxu0 %v1806
    %1815 = vmatprep.subr.mxu0 0.0
    %1816 = vmatpush1.msra.mxu0 %v1805
    %1817 = vmatprep.subr.mxu0 0.0
    %1818 = vmatpush1.msra.mxu0 %v1804
    %1819 = vmatprep.subr.mxu0 0.0
    %1820 = vmatpush1.msra.mxu0 %v1803
    %1821 = vmatprep.subr.mxu0 0.0
    %1822 = vmatpush1.msra.mxu0 %v1802
    %1823 = vmatprep.subr.mxu0 0.0
    %1824 = vmatpush1.msra.mxu0 %v1801
    %1825 = vmatprep.subr.mxu0 0.0
    %1826 = vmatpush1.msra.mxu0 %v1800
    %1827 = vmatprep.subr.mxu0 0.0
    %1828 = vmatpush1.msra.mxu0 %v1799
    %1829 = vmatprep.subr.mxu0 0.0
    %1830 = vmatpush1.msra.mxu0 %v1798
    %1831 = vmatprep.subr.mxu0 0.0
    %1832 = vmatpush1.msra.mxu0 %v1797
    %1833 = vmatprep.subr.mxu0 0.0
    %1834 = vmatpush1.msra.mxu0 %v1796
    %1835 = vmatprep.subr.mxu0 0.0
    %1836 = vmatpush1.msra.mxu0 %v1795
    %1837 = vmatprep.subr.mxu0 0.0
    %1838 = vmatpush1.msra.mxu0 %v1794
    %1839 = vmatprep.subr.mxu0 0.0
    %1840 = vmatpush1.msra.mxu0 %v1793
    %1841 = vmatprep.subr.mxu0 0.0
    %1842 = vmatpush1.msra.mxu0 %v1792
    %1843 = vmatprep.subr.mxu0 0.0
    %1844 = vmatpush2.msra.mxu0 0.0
    %1845 = vmatprep.subr.mxu0 0.0
    %1846 = vmatpush2.msra.mxu0 0.0
    %1847 = vmatprep.subr.mxu0 0.0
    %1848 = vmatpush2.msra.mxu0 0.0
    %1849 = vmatprep.subr.mxu0 0.0
    %1850 = vmatpush2.msra.mxu0 0.0
    %1851 = vmatprep.subr.mxu0 0.0
    %1852 = vmatpush2.msra.mxu0 0.0
    %1853 = vmatprep.subr.mxu0 0.0
    %1854 = vmatpush2.msra.mxu0 0.0
    %1855 = vmatprep.subr.mxu0 0.0
    %1856 = vmatpush2.msra.mxu0 0.0
    %1857 = vmatprep.subr.mxu0 0.0
    %1858 = vmatpush2.msra.mxu0 0.0
    %1859 = vmatprep.subr.mxu0 0.0
    %1860 = vmatpush2.msra.mxu0 0.0
    %1861 = vmatprep.subr.mxu0 0.0
    %1862 = vmatpush2.msra.mxu0 0.0
    %1863 = vmatprep.subr.mxu0 0.0
    %1864 = vmatpush2.msra.mxu0 0.0
    %1865 = vmatprep.subr.mxu0 0.0
    %1866 = vmatpush2.msra.mxu0 0.0
    %1867 = vmatprep.subr.mxu0 0.0
    %1868 = vmatpush2.msra.mxu0 0.0
    %1869 = vmatprep.subr.mxu0 0.0
    %1870 = vmatpush2.msra.mxu0 0.0
    %1871 = vmatprep.subr.mxu0 0.0
    %1872 = vmatpush2.msra.mxu0 0.0
    %1873 = vmatprep.subr.mxu0 0.0
    %1874 = vmatpush2.msra.mxu0 0.0
    %1875 = vmatprep.mubr.f32.mxu0 0.0
    %1876 = vmatmul.mubr.f32.gmra.mxu0 %v1098
    %v1877 = vpop.f32.mrf.mxu0
    %v1878 = vadd.f32 0.0, %v1877
    %v1879 = vpop.f32.mrf.mxu0
    %1880 = vdwg.mxu0
    %v1881 = vrcp.pop %v1878
    %v1882 = vadd.f32 %v1878, %v1810
    %v1883 = vrcp.pop %v1882
    %v1884 = vmul.f32 %v1810, %v1883
    %v1885 = vmul.f32 %v1792, %v980
    %v1886 = vmul.f32 %v1793, %v981
    %v1887 = vmul.f32 %v1794, %v982
    %v1888 = vmul.f32 %v1795, %v983
    %v1889 = vmul.f32 %v1796, %v984
    %v1890 = vmul.f32 %v1797, %v985
    %v1891 = vmul.f32 %v1798, %v986
    %v1892 = vmul.f32 %v1799, %v987
    %v1893 = vmul.f32 %v1800, %v988
    %v1894 = vmul.f32 %v1801, %v989
    %v1895 = vmul.f32 %v1802, %v990
    %v1896 = vmul.f32 %v1803, %v991
    %v1897 = vmul.f32 %v1804, %v992
    %v1898 = vmul.f32 %v1805, %v993
    %v1899 = vmul.f32 %v1806, %v994
    %v1900 = vmul.f32 %v1807, %v995
    %1901 = vmatprep.subr.mxu0 0.0
    %1902 = vmatpush1.msra.mxu0 %v1900
    %1903 = vmatprep.subr.mxu0 0.0
    %1904 = vmatpush1.msra.mxu0 %v1899
    %1905 = vmatprep.subr.mxu0 0.0
    %1906 = vmatpush1.msra.mxu0 %v1898
    %1907 = vmatprep.subr.mxu0 0.0
    %1908 = vmatpush1.msra.mxu0 %v1897
    %1909 = vmatprep.subr.mxu0 0.0
    %1910 = vmatpush1.msra.mxu0 %v1896
    %1911 = vmatprep.subr.mxu0 0.0
    %1912 = vmatpush1.msra.mxu0 %v1895
    %1913 = vmatprep.subr.mxu0 0.0
    %1914 = vmatpush1.msra.mxu0 %v1894
    %1915 = vmatprep.subr.mxu0 0.0
    %1916 = vmatpush1.msra.mxu0 %v1893
    %1917 = vmatprep.subr.mxu0 0.0
    %1918 = vmatpush1.msra.mxu0 %v1892
    %1919 = vmatprep.subr.mxu0 0.0
    %1920 = vmatpush1.msra.mxu0 %v1891
    %1921 = vmatprep.subr.mxu0 0.0
    %1922 = vmatpush1.msra.mxu0 %v1890
    %1923 = vmatprep.subr.mxu0 0.0
    %1924 = vmatpush1.msra.mxu0 %v1889
    %1925 = vmatprep.subr.mxu0 0.0
    %1926 = vmatpush1.msra.mxu0 %v1888
    %1927 = vmatprep.subr.mxu0 0.0
    %1928 = vmatpush1.msra.mxu0 %v1887
    %1929 = vmatprep.subr.mxu0 0.0
    %1930 = vmatpush1.msra.mxu0 %v1886
    %1931 = vmatprep.subr.mxu0 0.0
    %1932 = vmatpush1.msra.mxu0 %v1885
    %1933 = vmatprep.subr.mxu0 0.0
    %1934 = vmatpush2.msra.mxu0 0.0
    %1935 = vmatprep.subr.mxu0 0.0
    %1936 = vmatpush2.msra.mxu0 0.0
    %1937 = vmatprep.subr.mxu0 0.0
    %1938 = vmatpush2.msra.mxu0 0.0
    %1939 = vmatprep.subr.mxu0 0.0
    %1940 = vmatpush2.msra.mxu0 0.0
    %1941 = vmatprep.subr.mxu0 0.0
    %1942 = vmatpush2.msra.mxu0 0.0
    %1943 = vmatprep.subr.mxu0 0.0
    %1944 = vmatpush2.msra.mxu0 0.0
    %1945 = vmatprep.subr.mxu0 0.0
    %1946 = vmatpush2.msra.mxu0 0.0
    %1947 = vmatprep.subr.mxu0 0.0
    %1948 = vmatpush2.msra.mxu0 0.0
    %1949 = vmatprep.subr.mxu0 0.0
    %1950 = vmatpush2.msra.mxu0 0.0
    %1951 = vmatprep.subr.mxu0 0.0
    %1952 = vmatpush2.msra.mxu0 0.0
    %1953 = vmatprep.subr.mxu0 0.0
    %1954 = vmatpush2.msra.mxu0 0.0
    %1955 = vmatprep.subr.mxu0 0.0
    %1956 = vmatpush2.msra.mxu0 0.0
    %1957 = vmatprep.subr.mxu0 0.0
    %1958 = vmatpush2.msra.mxu0 0.0
    %1959 = vmatprep.subr.mxu0 0.0
    %1960 = vmatpush2.msra.mxu0 0.0
    %1961 = vmatprep.subr.mxu0 0.0
    %1962 = vmatpush2.msra.mxu0 0.0
    %1963 = vmatprep.subr.mxu0 0.0
    %1964 = vmatpush2.msra.mxu0 0.0
    %1965 = vmatprep.mubr.f32.mxu0 0.0
    %1966 = vmatmul.mubr.f32.gmra.mxu0 %v1098
    %v1967 = vpop.f32.mrf.mxu0
    %v1968 = vadd.f32 0.0, %v1967
    %v1969 = vpop.f32.mrf.mxu0
    %1970 = vdwg.mxu0
    %1972 = vset.pattern.permute.xlu0 0
    %1973 = vperm.xlu0 %1972, %v1881
    %v1974 = vpop.permute.xlu0 %1973
    %v1976 = vmul.f32 %v1968, %v1974
    %1978 = vset.pattern.permute.xlu0 0
    %1979 = vperm.xlu0 %1978, %v1884
    %v1980 = vpop.permute.xlu0 %1979
    %v1982 = vmul.f32 %v1980, %v794
    %v1983 = vsub.f32 1.0, %v1884
    %1985 = vset.pattern.permute.xlu0 0
    %1986 = vperm.xlu0 %1985, %v1983
    %v1987 = vpop.permute.xlu0 %1986
    %v1989 = vmul.f32 %v1987, %v1976
    %v1990 = vadd.f32 %v1982, %v1989
    %v1991 = vadd.f32 %v1990, %v793
    %1992 = vst [vmem:[%s9] sm:$0x3] %v1991
    %1993 = vst [vmem:[#allocation5] sm:$0x3] %v793
    %1994 = vst [vmem:[#allocation6] sm:$0x3] %v791
    // Predicated region
    $region42: #{adaptive_attention_lstm_forward.2} parent=1 // pred_check
      _
    $region43: #{adaptive_attention_lstm_forward.2} parent=1 // pred_check_branch
      %1996 = sbr.rel (0) target = $region45
    $region44: #{adaptive_attention_lstm_forward.2} parent=1 // pred_region
      _
    $region45: #{adaptive_attention_lstm_forward.2} parent=1 // pred_fallthru
      _
    // Predicated region
    $region46: #{adaptive_attention_lstm_forward.2} parent=1 // pred_check
      _
    $region47: #{adaptive_attention_lstm_forward.2} parent=1 // pred_check_branch
      %1998 = sbr.rel (0) target = $region49
    $region48: #{adaptive_attention_lstm_forward.2} parent=1 // pred_region
      %s2000 = ssub.s32 32, 32
      %2001 = vsyncadd [#allocation4], %s2000
      %s2003 = sshll.u32 [#allocation5], 4
      %s2004 = int_to_ptr.vmem [resolvable:$true] %s2003
      %2006 = dma.vmem_to_hbm [thread:$0]  %s2004, 32, %s10, [#allocation4]
    $region49: #{adaptive_attention_lstm_forward.2} parent=1 // pred_fallthru
      _
    // Predicated region
    $region50: #{adaptive_attention_lstm_forward.2} parent=1 // pred_check
      _
    $region51: #{adaptive_attention_lstm_forward.2} parent=1 // pred_check_branch
      %2008 = sbr.rel (0) target = $region53
    $region52: #{adaptive_attention_lstm_forward.2} parent=1 // pred_region
      %s2010 = ssub.s32 32, 32
      %2011 = vsyncadd [#allocation7], %s2010
      %s2013 = sshll.u32 [#allocation6], 4
      %s2014 = int_to_ptr.vmem [resolvable:$true] %s2013
      %2016 = dma.vmem_to_hbm [thread:$0]  %s2014, 32, %s11, [#allocation7]
    $region53: #{adaptive_attention_lstm_forward.2} parent=1 // pred_fallthru
      _
    // Predicated region
    $region54: #{adaptive_attention_lstm_forward.2} parent=1 // pred_check
      _
    $region55: #{adaptive_attention_lstm_forward.2} parent=1 // pred_check_branch
      %2018 = sbr.rel (0) target = $region57
    $region56: #{adaptive_attention_lstm_forward.2} parent=1 // pred_region
      _
    $region57: #{adaptive_attention_lstm_forward.2} parent=1 // pred_fallthru
      _
    // Predicated region
    $region58: #{adaptive_attention_lstm_forward.2} parent=1 // pred_check
      _
    $region59: #{adaptive_attention_lstm_forward.2} parent=1 // pred_check_branch
      %2020 = sbr.rel (0) target = $region61
    $region60: #{adaptive_attention_lstm_forward.2} parent=1 // pred_region
      %2021 = dma.done [#allocation4], 32
    $region61: #{adaptive_attention_lstm_forward.2} parent=1 // pred_fallthru
      _
    // Predicated region
    $region62: #{adaptive_attention_lstm_forward.2} parent=1 // pred_check
      _
    $region63: #{adaptive_attention_lstm_forward.2} parent=1 // pred_check_branch
      %2023 = sbr.rel (0) target = $region65
    $region64: #{adaptive_attention_lstm_forward.2} parent=1 // pred_region
      %2024 = dma.done [#allocation7], 32
    $region65: #{adaptive_attention_lstm_forward.2} parent=1 // pred_fallthru
      _
    %2025 = vsyncpa [#allocation3], 1
    %2026 = vsyncpa [#allocation4], 1
    %2027 = vsyncpa [#allocation7], 1

</llo_original>
